<compile_context>
chip_gen: v5e
topology: v5e:2x2
jax: 0.10.0
libtpu: 0.0.40
codegen_flags: <defaults>
</compile_context>

<pallas_src>
import jax
import jax.numpy as jnp
from jax.experimental import pallas as pl
from jax.experimental.pallas import tpu as pltpu

B = 2      # batch
T = 8      # sequence length
H = 32     # embedding / hidden size (nn.Embedding(n_vocab, 32), LSTM(32, 32, 2))
L = 2      # LSTM layers
V = 50     # n_vocab
G = 4 * H  # gate width = 128 (exactly one lane group)
VP = 128   # vocab lane-padded to 128 (lane-dense output / MXU K dim)

# Row offsets inside the 128-lane packed slab (all 8-sublane aligned).
R_PRE0 = 0               # (VP, 4H) fused embedding + layer-0 input projection
R_B1 = R_PRE0 + VP       # 128  : layer-1 fused bias (row 0 of an 8-row pad)
R_FCW = R_B1 + 8         # 136  : fc weight (H, VP)
R_FCB = R_FCW + H        # 168  : fc bias   (row 0 of an 8-row pad)
PACK_ROWS = R_FCB + 8    # 176


def leonard_lstm_kernel(ids_ref, w_ref, wf_ref, out_ref):
    # ---- embedding + layer-0 input projection for ALL timesteps: 1 MXU pass -
    # TODO(synk): out-of-range / negative token ids map to a zero row here
    # instead of raising like nn.Embedding; inputs must be in [0, V).
    ids = ids_ref[...]                                            # (T*B, 1) int32
    iota_v = jax.lax.broadcasted_iota(jnp.int32, (T * B, VP), 1)  # (T*B, VP)
    onehot = (ids == iota_v).astype(jnp.float32)                  # (T*B, VP)
    pre0 = jnp.dot(onehot, w_ref[R_PRE0:R_PRE0 + VP, :],
                   preferred_element_type=jnp.float32)            # (T*B, 4H)

    b1 = w_ref[R_B1:R_B1 + 1, :]                                  # (1, 4H)
    fcw = w_ref[R_FCW:R_FCW + H, :]                               # (H, VP)
    fcb = w_ref[R_FCB:R_FCB + 1, :]                               # (1, VP)
    wf = wf_ref[...]                                              # (2H, 8H)

    def cell(gates, c):
        # gate order here is (i, f, o, g): one contiguous sigmoid slab (3H)
        # and one tanh slab (H) -> minimal EUP element count, 2 pushes.
        sg = jax.nn.sigmoid(gates[:, :3 * H])                     # (B, 3H)
        g_g = jnp.tanh(gates[:, 3 * H:4 * H])                     # (B, H)
        i_g = sg[:, 0 * H:1 * H]
        f_g = sg[:, 1 * H:2 * H]
        o_g = sg[:, 2 * H:3 * H]
        c_new = f_g * c + i_g * g_g
        h_new = o_g * jnp.tanh(c_new)
        return h_new, c_new

    c0 = jnp.zeros((B, H), jnp.float32)
    h1 = jnp.zeros((B, H), jnp.float32)
    c1 = jnp.zeros((B, H), jnp.float32)

    # Step 0, layer 0: h0_init == 0, so the gates are exactly pre0[0] - free.
    h0, c0 = cell(pre0[0:B, :], c0)

    # Fully-unrolled static recurrence (one basic block).  Each iteration does
    # ONE fused MXU pass that yields both this step's layer-1 gates and the
    # next step's layer-0 hidden contribution; the two cell() updates that
    # follow are independent of each other, so the scheduler overlaps them.
    for step in range(T):
        x1h1 = jnp.concatenate([h0, h1], axis=-1)                 # (B, 2H)
        fused = jnp.dot(x1h1, wf,
                        preferred_element_type=jnp.float32)       # (B, 8H)
        # layer 1 at `step`
        h1, c1 = cell(fused[:, :G] + b1, c1)
        # layer 0 at `step + 1` (its input projection is already in pre0)
        if step + 1 < T:
            g0 = pre0[(step + 1) * B:(step + 2) * B, :] + fused[:, G:2 * G]
            h0, c0 = cell(g0, c0)

    # ---- final linear on last-step top-layer hidden, lane-dense store -------
    out_ref[...] = jnp.dot(h1, fcw, preferred_element_type=jnp.float32) + fcb


def _permute_gates(w):
    """Reorder gate columns from PyTorch's (i, f, g, o) to kernel (i, f, o, g)."""
    return jnp.concatenate(
        [w[..., 0 * H:1 * H], w[..., 1 * H:2 * H],
         w[..., 3 * H:4 * H], w[..., 2 * H:3 * H]], axis=-1)


def pack_weights(emb, wih, whh, b, fcw, fcb):
    """Fuse + lane-pad parameters into a (176,128) slab and a (64,256) fused
    recurrent weight (2 tiny DMAs total)."""
    emb_p = jnp.zeros((VP, H), jnp.float32).at[:V, :].set(emb)
    pre0_table = _permute_gates(jnp.dot(emb_p, wih[0]) + b[0])    # (VP, 4H)
    b1 = jnp.zeros((8, G), jnp.float32).at[0:1, :].set(_permute_gates(b[1]))
    fcw_p = jnp.zeros((H, VP), jnp.float32).at[:, :V].set(fcw)
    fcb_p = jnp.zeros((8, VP), jnp.float32).at[0, :V].set(fcb[0])
    slab = jnp.concatenate([pre0_table, b1, fcw_p, fcb_p], axis=0)  # (176, 128)

    # Fused recurrent weight: [h0_t, h1_{t-1}] @ wf = [g1_t | h0_t @ W_hh0]
    top = jnp.concatenate([_permute_gates(wih[1]), _permute_gates(whh[0])],
                          axis=1)                                 # (H, 8H)
    bot = jnp.concatenate([_permute_gates(whh[1]), jnp.zeros((H, G), jnp.float32)],
                          axis=1)                                 # (H, 8H)
    wf = jnp.concatenate([top, bot], axis=0)                      # (2H, 8H)
    return slab, wf


def leonard_lstm(ids, emb, wih, whh, b, fcw, fcb):
    """ids: (B, T) int32 token indices.  Returns (B, V) float32 logits."""
    # Time-major flatten so each timestep is a contiguous row block in-kernel.
    ids_tb = jnp.transpose(ids).reshape(T * B, 1).astype(jnp.int32)
    slab, wf = pack_weights(emb, wih, whh, b, fcw, fcb)
    vmem = pl.BlockSpec(memory_space=pltpu.MemorySpace.VMEM)
    out = pl.pallas_call(
        leonard_lstm_kernel,
        out_shape=jax.ShapeDtypeStruct((B, VP), jnp.float32),     # lane-dense
        in_specs=[vmem, vmem, vmem],
        out_specs=vmem,
    )(ids_tb, slab, wf)
    return out[:, :V]


def init_params(key):
    ks = jax.random.split(key, 7)
    scale = 1.0 / jnp.sqrt(jnp.float32(H))
    emb = jax.random.normal(ks[0], (V, H), jnp.float32) * 0.1
    wih = jax.random.uniform(ks[1], (L, H, 4 * H), jnp.float32, -scale, scale)
    whh = jax.random.uniform(ks[2], (L, H, 4 * H), jnp.float32, -scale, scale)
    b_ih = jax.random.uniform(ks[3], (L, 1, 4 * H), jnp.float32, -scale, scale)
    b_hh = jax.random.uniform(ks[4], (L, 1, 4 * H), jnp.float32, -scale, scale)
    b = b_ih + b_hh                      # fused LSTM biases
    fcw = jax.random.uniform(ks[5], (H, V), jnp.float32, -scale, scale)
    fcb = jax.random.uniform(ks[6], (1, V), jnp.float32, -scale, scale)
    return emb, wih, whh, b, fcw, fcb


def leonard_lstm_ref(ids, emb, wih, whh, b, fcw, fcb):
    """Pure-JAX reference mirroring the PyTorch forward (eval mode)."""
    x = emb[ids]                                  # (B, T, H)
    h = [jnp.zeros((B, H), jnp.float32) for _ in range(L)]
    c = [jnp.zeros((B, H), jnp.float32) for _ in range(L)]
    for t in range(T):
        inp = x[:, t, :]
        for l in range(L):
            gates = inp @ wih[l] + h[l] @ whh[l] + b[l]
            i_g = jax.nn.sigmoid(gates[:, 0 * H:1 * H])
            f_g = jax.nn.sigmoid(gates[:, 1 * H:2 * H])
            g_g = jnp.tanh(gates[:, 2 * H:3 * H])
            o_g = jax.nn.sigmoid(gates[:, 3 * H:4 * H])
            c[l] = f_g * c[l] + i_g * g_g
            h[l] = o_g * jnp.tanh(c[l])
            inp = h[l]
    return h[L - 1] @ fcw + fcb


if __name__ == "__main__":
    key = jax.random.PRNGKey(0)
    k_ids, k_params = jax.random.split(key)
    params = init_params(k_params)
    ids = jax.random.randint(k_ids, (B, T), 0, V, dtype=jnp.int32)

    logits = jax.jit(leonard_lstm)(ids, *params)
    jax.block_until_ready(logits)
    assert logits.shape == (B, V) and logits.dtype == jnp.float32

    ref = leonard_lstm_ref(ids, *params)
    max_err = float(jnp.max(jnp.abs(logits - ref)))
    assert jnp.allclose(logits, ref, atol=1e-2, rtol=1e-2), max_err
    print("KERNEL_OK")
</pallas_src>

<mosaic_0001>
module attributes {stable_mosaic.version = 11 : i64} {
  func.func @leonard_lstm_kernel(%arg0: memref<16x1xi32, #tpu.memory_space<vmem>>, %arg1: memref<176x128xf32, #tpu.memory_space<vmem>>, %arg2: memref<64x256xf32, #tpu.memory_space<vmem>>, %arg3: memref<2x128xf32, #tpu.memory_space<vmem>>) attributes {dimension_semantics = [], scalar_prefetch = 0 : i64, scratch_operands = 0 : i64, tpu.core_type = #tpu.core_type<tc>} {
    %c0 = arith.constant 0 : index
    %c0_0 = arith.constant 0 : index
    %0 = vector.load %arg0[%c0, %c0_0] : memref<16x1xi32, #tpu.memory_space<vmem>>, vector<16x1xi32>
    %1 = tpu.iota {dimensions = array<i32: 1>} : vector<16x128xi32>
    %2 = vector.broadcast %0 : vector<16x1xi32> to vector<16x128xi32>
    %3 = arith.cmpi eq, %2, %1 : vector<16x128xi32>
    %4 = arith.extui %3 : vector<16x128xi1> to vector<16x128xi32>
    %5 = arith.sitofp %4 : vector<16x128xi32> to vector<16x128xf32>
    %c0_1 = arith.constant 0 : index
    %c0_2 = arith.constant 0 : index
    %6 = vector.load %arg1[%c0_1, %c0_2] : memref<176x128xf32, #tpu.memory_space<vmem>>, vector<128x128xf32>
    %cst = arith.constant dense<0.000000e+00> : vector<16x128xf32>
    %7 = tpu.matmul %5, %6, %cst {dimension_numbers = #tpu.dot_dimension_numbers<[1], [0], [0], [1], [0, 0, 1, 1], [], []>} : vector<16x128xf32>, vector<128x128xf32>, vector<16x128xf32> -> vector<16x128xf32>
    %c128 = arith.constant 128 : index
    %c0_3 = arith.constant 0 : index
    %8 = vector.load %arg1[%c128, %c0_3] : memref<176x128xf32, #tpu.memory_space<vmem>>, vector<1x128xf32>
    %c136 = arith.constant 136 : index
    %c0_4 = arith.constant 0 : index
    %9 = vector.load %arg1[%c136, %c0_4] : memref<176x128xf32, #tpu.memory_space<vmem>>, vector<32x128xf32>
    %c168 = arith.constant 168 : index
    %c0_5 = arith.constant 0 : index
    %10 = vector.load %arg1[%c168, %c0_5] : memref<176x128xf32, #tpu.memory_space<vmem>>, vector<1x128xf32>
    %c0_6 = arith.constant 0 : index
    %c0_7 = arith.constant 0 : index
    %11 = vector.load %arg2[%c0_6, %c0_7] : memref<64x256xf32, #tpu.memory_space<vmem>>, vector<64x256xf32>
    %cst_8 = arith.constant 0.000000e+00 : f32
    %12 = vector.broadcast %cst_8 : f32 to vector<2x32xf32>
    %cst_9 = arith.constant 0.000000e+00 : f32
    %13 = vector.broadcast %cst_9 : f32 to vector<2x32xf32>
    %cst_10 = arith.constant 0.000000e+00 : f32
    %14 = vector.broadcast %cst_10 : f32 to vector<2x32xf32>
    %15 = vector.extract_strided_slice %7 {offsets = [0, 0], sizes = [2, 128], strides = [1, 1]} : vector<16x128xf32> to vector<2x128xf32>
    %16 = vector.extract_strided_slice %15 {offsets = [0, 0], sizes = [2, 96], strides = [1, 1]} : vector<2x128xf32> to vector<2x96xf32>
    %17 = arith.negf %16 : vector<2x96xf32>
    %18 = math.exp %17 : vector<2x96xf32>
    %cst_11 = arith.constant 1.000000e+00 : f32
    %19 = vector.broadcast %cst_11 : f32 to vector<2x96xf32>
    %20 = arith.addf %19, %18 : vector<2x96xf32>
    %21 = arith.divf %19, %20 : vector<2x96xf32>
    %22 = vector.extract_strided_slice %15 {offsets = [0, 96], sizes = [2, 32], strides = [1, 1]} : vector<2x128xf32> to vector<2x32xf32>
    %23 = math.tanh %22 : vector<2x32xf32>
    %24 = vector.extract_strided_slice %21 {offsets = [0, 0], sizes = [2, 32], strides = [1, 1]} : vector<2x96xf32> to vector<2x32xf32>
    %25 = vector.extract_strided_slice %21 {offsets = [0, 32], sizes = [2, 32], strides = [1, 1]} : vector<2x96xf32> to vector<2x32xf32>
    %26 = vector.extract_strided_slice %21 {offsets = [0, 64], sizes = [2, 32], strides = [1, 1]} : vector<2x96xf32> to vector<2x32xf32>
    %27 = arith.mulf %25, %12 : vector<2x32xf32>
    %28 = arith.mulf %24, %23 : vector<2x32xf32>
    %29 = arith.addf %27, %28 : vector<2x32xf32>
    %30 = math.tanh %29 : vector<2x32xf32>
    %31 = arith.mulf %26, %30 : vector<2x32xf32>
    %32 = tpu.concatenate %31, %13 in 1 : vector<2x32xf32>, vector<2x32xf32> -> vector<2x64xf32>
    %cst_12 = arith.constant dense<0.000000e+00> : vector<2x256xf32>
    %33 = tpu.matmul %32, %11, %cst_12 {dimension_numbers = #tpu.dot_dimension_numbers<[1], [0], [0], [1], [0, 0, 1, 1], [], []>} : vector<2x64xf32>, vector<64x256xf32>, vector<2x256xf32> -> vector<2x256xf32>
    %34 = vector.extract_strided_slice %33 {offsets = [0, 0], sizes = [2, 128], strides = [1, 1]} : vector<2x256xf32> to vector<2x128xf32>
    %35 = vector.broadcast %8 : vector<1x128xf32> to vector<2x128xf32>
    %36 = arith.addf %34, %35 : vector<2x128xf32>
    %37 = vector.extract_strided_slice %36 {offsets = [0, 0], sizes = [2, 96], strides = [1, 1]} : vector<2x128xf32> to vector<2x96xf32>
    %38 = arith.negf %37 : vector<2x96xf32>
    %39 = math.exp %38 : vector<2x96xf32>
    %cst_13 = arith.constant 1.000000e+00 : f32
    %40 = vector.broadcast %cst_13 : f32 to vector<2x96xf32>
    %41 = arith.addf %40, %39 : vector<2x96xf32>
    %42 = arith.divf %40, %41 : vector<2x96xf32>
    %43 = vector.extract_strided_slice %36 {offsets = [0, 96], sizes = [2, 32], strides = [1, 1]} : vector<2x128xf32> to vector<2x32xf32>
    %44 = math.tanh %43 : vector<2x32xf32>
    %45 = vector.extract_strided_slice %42 {offsets = [0, 0], sizes = [2, 32], strides = [1, 1]} : vector<2x96xf32> to vector<2x32xf32>
    %46 = vector.extract_strided_slice %42 {offsets = [0, 32], sizes = [2, 32], strides = [1, 1]} : vector<2x96xf32> to vector<2x32xf32>
    %47 = vector.extract_strided_slice %42 {offsets = [0, 64], sizes = [2, 32], strides = [1, 1]} : vector<2x96xf32> to vector<2x32xf32>
    %48 = arith.mulf %46, %14 : vector<2x32xf32>
    %49 = arith.mulf %45, %44 : vector<2x32xf32>
    %50 = arith.addf %48, %49 : vector<2x32xf32>
    %51 = math.tanh %50 : vector<2x32xf32>
    %52 = arith.mulf %47, %51 : vector<2x32xf32>
    %53 = vector.extract_strided_slice %7 {offsets = [2, 0], sizes = [2, 128], strides = [1, 1]} : vector<16x128xf32> to vector<2x128xf32>
    %54 = vector.extract_strided_slice %33 {offsets = [0, 128], sizes = [2, 128], strides = [1, 1]} : vector<2x256xf32> to vector<2x128xf32>
    %55 = arith.addf %53, %54 : vector<2x128xf32>
    %56 = vector.extract_strided_slice %55 {offsets = [0, 0], sizes = [2, 96], strides = [1, 1]} : vector<2x128xf32> to vector<2x96xf32>
    %57 = arith.negf %56 : vector<2x96xf32>
    %58 = math.exp %57 : vector<2x96xf32>
    %cst_14 = arith.constant 1.000000e+00 : f32
    %59 = vector.broadcast %cst_14 : f32 to vector<2x96xf32>
    %60 = arith.addf %59, %58 : vector<2x96xf32>
    %61 = arith.divf %59, %60 : vector<2x96xf32>
    %62 = vector.extract_strided_slice %55 {offsets = [0, 96], sizes = [2, 32], strides = [1, 1]} : vector<2x128xf32> to vector<2x32xf32>
    %63 = math.tanh %62 : vector<2x32xf32>
    %64 = vector.extract_strided_slice %61 {offsets = [0, 0], sizes = [2, 32], strides = [1, 1]} : vector<2x96xf32> to vector<2x32xf32>
    %65 = vector.extract_strided_slice %61 {offsets = [0, 32], sizes = [2, 32], strides = [1, 1]} : vector<2x96xf32> to vector<2x32xf32>
    %66 = vector.extract_strided_slice %61 {offsets = [0, 64], sizes = [2, 32], strides = [1, 1]} : vector<2x96xf32> to vector<2x32xf32>
    %67 = arith.mulf %65, %29 : vector<2x32xf32>
    %68 = arith.mulf %64, %63 : vector<2x32xf32>
    %69 = arith.addf %67, %68 : vector<2x32xf32>
    %70 = math.tanh %69 : vector<2x32xf32>
    %71 = arith.mulf %66, %70 : vector<2x32xf32>
    %72 = tpu.concatenate %71, %52 in 1 : vector<2x32xf32>, vector<2x32xf32> -> vector<2x64xf32>
    %cst_15 = arith.constant dense<0.000000e+00> : vector<2x256xf32>
    %73 = tpu.matmul %72, %11, %cst_15 {dimension_numbers = #tpu.dot_dimension_numbers<[1], [0], [0], [1], [0, 0, 1, 1], [], []>} : vector<2x64xf32>, vector<64x256xf32>, vector<2x256xf32> -> vector<2x256xf32>
    %74 = vector.extract_strided_slice %73 {offsets = [0, 0], sizes = [2, 128], strides = [1, 1]} : vector<2x256xf32> to vector<2x128xf32>
    %75 = vector.broadcast %8 : vector<1x128xf32> to vector<2x128xf32>
    %76 = arith.addf %74, %75 : vector<2x128xf32>
    %77 = vector.extract_strided_slice %76 {offsets = [0, 0], sizes = [2, 96], strides = [1, 1]} : vector<2x128xf32> to vector<2x96xf32>
    %78 = arith.negf %77 : vector<2x96xf32>
    %79 = math.exp %78 : vector<2x96xf32>
    %cst_16 = arith.constant 1.000000e+00 : f32
    %80 = vector.broadcast %cst_16 : f32 to vector<2x96xf32>
    %81 = arith.addf %80, %79 : vector<2x96xf32>
    %82 = arith.divf %80, %81 : vector<2x96xf32>
    %83 = vector.extract_strided_slice %76 {offsets = [0, 96], sizes = [2, 32], strides = [1, 1]} : vector<2x128xf32> to vector<2x32xf32>
    %84 = math.tanh %83 : vector<2x32xf32>
    %85 = vector.extract_strided_slice %82 {offsets = [0, 0], sizes = [2, 32], strides = [1, 1]} : vector<2x96xf32> to vector<2x32xf32>
    %86 = vector.extract_strided_slice %82 {offsets = [0, 32], sizes = [2, 32], strides = [1, 1]} : vector<2x96xf32> to vector<2x32xf32>
    %87 = vector.extract_strided_slice %82 {offsets = [0, 64], sizes = [2, 32], strides = [1, 1]} : vector<2x96xf32> to vector<2x32xf32>
    %88 = arith.mulf %86, %50 : vector<2x32xf32>
    %89 = arith.mulf %85, %84 : vector<2x32xf32>
    %90 = arith.addf %88, %89 : vector<2x32xf32>
    %91 = math.tanh %90 : vector<2x32xf32>
    %92 = arith.mulf %87, %91 : vector<2x32xf32>
    %93 = vector.extract_strided_slice %7 {offsets = [4, 0], sizes = [2, 128], strides = [1, 1]} : vector<16x128xf32> to vector<2x128xf32>
    %94 = vector.extract_strided_slice %73 {offsets = [0, 128], sizes = [2, 128], strides = [1, 1]} : vector<2x256xf32> to vector<2x128xf32>
    %95 = arith.addf %93, %94 : vector<2x128xf32>
    %96 = vector.extract_strided_slice %95 {offsets = [0, 0], sizes = [2, 96], strides = [1, 1]} : vector<2x128xf32> to vector<2x96xf32>
    %97 = arith.negf %96 : vector<2x96xf32>
    %98 = math.exp %97 : vector<2x96xf32>
    %cst_17 = arith.constant 1.000000e+00 : f32
    %99 = vector.broadcast %cst_17 : f32 to vector<2x96xf32>
    %100 = arith.addf %99, %98 : vector<2x96xf32>
    %101 = arith.divf %99, %100 : vector<2x96xf32>
    %102 = vector.extract_strided_slice %95 {offsets = [0, 96], sizes = [2, 32], strides = [1, 1]} : vector<2x128xf32> to vector<2x32xf32>
    %103 = math.tanh %102 : vector<2x32xf32>
    %104 = vector.extract_strided_slice %101 {offsets = [0, 0], sizes = [2, 32], strides = [1, 1]} : vector<2x96xf32> to vector<2x32xf32>
    %105 = vector.extract_strided_slice %101 {offsets = [0, 32], sizes = [2, 32], strides = [1, 1]} : vector<2x96xf32> to vector<2x32xf32>
    %106 = vector.extract_strided_slice %101 {offsets = [0, 64], sizes = [2, 32], strides = [1, 1]} : vector<2x96xf32> to vector<2x32xf32>
    %107 = arith.mulf %105, %69 : vector<2x32xf32>
    %108 = arith.mulf %104, %103 : vector<2x32xf32>
    %109 = arith.addf %107, %108 : vector<2x32xf32>
    %110 = math.tanh %109 : vector<2x32xf32>
    %111 = arith.mulf %106, %110 : vector<2x32xf32>
    %112 = tpu.concatenate %111, %92 in 1 : vector<2x32xf32>, vector<2x32xf32> -> vector<2x64xf32>
    %cst_18 = arith.constant dense<0.000000e+00> : vector<2x256xf32>
    %113 = tpu.matmul %112, %11, %cst_18 {dimension_numbers = #tpu.dot_dimension_numbers<[1], [0], [0], [1], [0, 0, 1, 1], [], []>} : vector<2x64xf32>, vector<64x256xf32>, vector<2x256xf32> -> vector<2x256xf32>
    %114 = vector.extract_strided_slice %113 {offsets = [0, 0], sizes = [2, 128], strides = [1, 1]} : vector<2x256xf32> to vector<2x128xf32>
    %115 = vector.broadcast %8 : vector<1x128xf32> to vector<2x128xf32>
    %116 = arith.addf %114, %115 : vector<2x128xf32>
    %117 = vector.extract_strided_slice %116 {offsets = [0, 0], sizes = [2, 96], strides = [1, 1]} : vector<2x128xf32> to vector<2x96xf32>
    %118 = arith.negf %117 : vector<2x96xf32>
    %119 = math.exp %118 : vector<2x96xf32>
    %cst_19 = arith.constant 1.000000e+00 : f32
    %120 = vector.broadcast %cst_19 : f32 to vector<2x96xf32>
    %121 = arith.addf %120, %119 : vector<2x96xf32>
    %122 = arith.divf %120, %121 : vector<2x96xf32>
    %123 = vector.extract_strided_slice %116 {offsets = [0, 96], sizes = [2, 32], strides = [1, 1]} : vector<2x128xf32> to vector<2x32xf32>
    %124 = math.tanh %123 : vector<2x32xf32>
    %125 = vector.extract_strided_slice %122 {offsets = [0, 0], sizes = [2, 32], strides = [1, 1]} : vector<2x96xf32> to vector<2x32xf32>
    %126 = vector.extract_strided_slice %122 {offsets = [0, 32], sizes = [2, 32], strides = [1, 1]} : vector<2x96xf32> to vector<2x32xf32>
    %127 = vector.extract_strided_slice %122 {offsets = [0, 64], sizes = [2, 32], strides = [1, 1]} : vector<2x96xf32> to vector<2x32xf32>
    %128 = arith.mulf %126, %90 : vector<2x32xf32>
    %129 = arith.mulf %125, %124 : vector<2x32xf32>
    %130 = arith.addf %128, %129 : vector<2x32xf32>
    %131 = math.tanh %130 : vector<2x32xf32>
    %132 = arith.mulf %127, %131 : vector<2x32xf32>
    %133 = vector.extract_strided_slice %7 {offsets = [6, 0], sizes = [2, 128], strides = [1, 1]} : vector<16x128xf32> to vector<2x128xf32>
    %134 = vector.extract_strided_slice %113 {offsets = [0, 128], sizes = [2, 128], strides = [1, 1]} : vector<2x256xf32> to vector<2x128xf32>
    %135 = arith.addf %133, %134 : vector<2x128xf32>
    %136 = vector.extract_strided_slice %135 {offsets = [0, 0], sizes = [2, 96], strides = [1, 1]} : vector<2x128xf32> to vector<2x96xf32>
    %137 = arith.negf %136 : vector<2x96xf32>
    %138 = math.exp %137 : vector<2x96xf32>
    %cst_20 = arith.constant 1.000000e+00 : f32
    %139 = vector.broadcast %cst_20 : f32 to vector<2x96xf32>
    %140 = arith.addf %139, %138 : vector<2x96xf32>
    %141 = arith.divf %139, %140 : vector<2x96xf32>
    %142 = vector.extract_strided_slice %135 {offsets = [0, 96], sizes = [2, 32], strides = [1, 1]} : vector<2x128xf32> to vector<2x32xf32>
    %143 = math.tanh %142 : vector<2x32xf32>
    %144 = vector.extract_strided_slice %141 {offsets = [0, 0], sizes = [2, 32], strides = [1, 1]} : vector<2x96xf32> to vector<2x32xf32>
    %145 = vector.extract_strided_slice %141 {offsets = [0, 32], sizes = [2, 32], strides = [1, 1]} : vector<2x96xf32> to vector<2x32xf32>
    %146 = vector.extract_strided_slice %141 {offsets = [0, 64], sizes = [2, 32], strides = [1, 1]} : vector<2x96xf32> to vector<2x32xf32>
    %147 = arith.mulf %145, %109 : vector<2x32xf32>
    %148 = arith.mulf %144, %143 : vector<2x32xf32>
    %149 = arith.addf %147, %148 : vector<2x32xf32>
    %150 = math.tanh %149 : vector<2x32xf32>
    %151 = arith.mulf %146, %150 : vector<2x32xf32>
    %152 = tpu.concatenate %151, %132 in 1 : vector<2x32xf32>, vector<2x32xf32> -> vector<2x64xf32>
    %cst_21 = arith.constant dense<0.000000e+00> : vector<2x256xf32>
    %153 = tpu.matmul %152, %11, %cst_21 {dimension_numbers = #tpu.dot_dimension_numbers<[1], [0], [0], [1], [0, 0, 1, 1], [], []>} : vector<2x64xf32>, vector<64x256xf32>, vector<2x256xf32> -> vector<2x256xf32>
    %154 = vector.extract_strided_slice %153 {offsets = [0, 0], sizes = [2, 128], strides = [1, 1]} : vector<2x256xf32> to vector<2x128xf32>
    %155 = vector.broadcast %8 : vector<1x128xf32> to vector<2x128xf32>
    %156 = arith.addf %154, %155 : vector<2x128xf32>
    %157 = vector.extract_strided_slice %156 {offsets = [0, 0], sizes = [2, 96], strides = [1, 1]} : vector<2x128xf32> to vector<2x96xf32>
    %158 = arith.negf %157 : vector<2x96xf32>
    %159 = math.exp %158 : vector<2x96xf32>
    %cst_22 = arith.constant 1.000000e+00 : f32
    %160 = vector.broadcast %cst_22 : f32 to vector<2x96xf32>
    %161 = arith.addf %160, %159 : vector<2x96xf32>
    %162 = arith.divf %160, %161 : vector<2x96xf32>
    %163 = vector.extract_strided_slice %156 {offsets = [0, 96], sizes = [2, 32], strides = [1, 1]} : vector<2x128xf32> to vector<2x32xf32>
    %164 = math.tanh %163 : vector<2x32xf32>
    %165 = vector.extract_strided_slice %162 {offsets = [0, 0], sizes = [2, 32], strides = [1, 1]} : vector<2x96xf32> to vector<2x32xf32>
    %166 = vector.extract_strided_slice %162 {offsets = [0, 32], sizes = [2, 32], strides = [1, 1]} : vector<2x96xf32> to vector<2x32xf32>
    %167 = vector.extract_strided_slice %162 {offsets = [0, 64], sizes = [2, 32], strides = [1, 1]} : vector<2x96xf32> to vector<2x32xf32>
    %168 = arith.mulf %166, %130 : vector<2x32xf32>
    %169 = arith.mulf %165, %164 : vector<2x32xf32>
    %170 = arith.addf %168, %169 : vector<2x32xf32>
    %171 = math.tanh %170 : vector<2x32xf32>
    %172 = arith.mulf %167, %171 : vector<2x32xf32>
    %173 = vector.extract_strided_slice %7 {offsets = [8, 0], sizes = [2, 128], strides = [1, 1]} : vector<16x128xf32> to vector<2x128xf32>
    %174 = vector.extract_strided_slice %153 {offsets = [0, 128], sizes = [2, 128], strides = [1, 1]} : vector<2x256xf32> to vector<2x128xf32>
    %175 = arith.addf %173, %174 : vector<2x128xf32>
    %176 = vector.extract_strided_slice %175 {offsets = [0, 0], sizes = [2, 96], strides = [1, 1]} : vector<2x128xf32> to vector<2x96xf32>
    %177 = arith.negf %176 : vector<2x96xf32>
    %178 = math.exp %177 : vector<2x96xf32>
    %cst_23 = arith.constant 1.000000e+00 : f32
    %179 = vector.broadcast %cst_23 : f32 to vector<2x96xf32>
    %180 = arith.addf %179, %178 : vector<2x96xf32>
    %181 = arith.divf %179, %180 : vector<2x96xf32>
    %182 = vector.extract_strided_slice %175 {offsets = [0, 96], sizes = [2, 32], strides = [1, 1]} : vector<2x128xf32> to vector<2x32xf32>
    %183 = math.tanh %182 : vector<2x32xf32>
    %184 = vector.extract_strided_slice %181 {offsets = [0, 0], sizes = [2, 32], strides = [1, 1]} : vector<2x96xf32> to vector<2x32xf32>
    %185 = vector.extract_strided_slice %181 {offsets = [0, 32], sizes = [2, 32], strides = [1, 1]} : vector<2x96xf32> to vector<2x32xf32>
    %186 = vector.extract_strided_slice %181 {offsets = [0, 64], sizes = [2, 32], strides = [1, 1]} : vector<2x96xf32> to vector<2x32xf32>
    %187 = arith.mulf %185, %149 : vector<2x32xf32>
    %188 = arith.mulf %184, %183 : vector<2x32xf32>
    %189 = arith.addf %187, %188 : vector<2x32xf32>
    %190 = math.tanh %189 : vector<2x32xf32>
    %191 = arith.mulf %186, %190 : vector<2x32xf32>
    %192 = tpu.concatenate %191, %172 in 1 : vector<2x32xf32>, vector<2x32xf32> -> vector<2x64xf32>
    %cst_24 = arith.constant dense<0.000000e+00> : vector<2x256xf32>
    %193 = tpu.matmul %192, %11, %cst_24 {dimension_numbers = #tpu.dot_dimension_numbers<[1], [0], [0], [1], [0, 0, 1, 1], [], []>} : vector<2x64xf32>, vector<64x256xf32>, vector<2x256xf32> -> vector<2x256xf32>
    %194 = vector.extract_strided_slice %193 {offsets = [0, 0], sizes = [2, 128], strides = [1, 1]} : vector<2x256xf32> to vector<2x128xf32>
    %195 = vector.broadcast %8 : vector<1x128xf32> to vector<2x128xf32>
    %196 = arith.addf %194, %195 : vector<2x128xf32>
    %197 = vector.extract_strided_slice %196 {offsets = [0, 0], sizes = [2, 96], strides = [1, 1]} : vector<2x128xf32> to vector<2x96xf32>
    %198 = arith.negf %197 : vector<2x96xf32>
    %199 = math.exp %198 : vector<2x96xf32>
    %cst_25 = arith.constant 1.000000e+00 : f32
    %200 = vector.broadcast %cst_25 : f32 to vector<2x96xf32>
    %201 = arith.addf %200, %199 : vector<2x96xf32>
    %202 = arith.divf %200, %201 : vector<2x96xf32>
    %203 = vector.extract_strided_slice %196 {offsets = [0, 96], sizes = [2, 32], strides = [1, 1]} : vector<2x128xf32> to vector<2x32xf32>
    %204 = math.tanh %203 : vector<2x32xf32>
    %205 = vector.extract_strided_slice %202 {offsets = [0, 0], sizes = [2, 32], strides = [1, 1]} : vector<2x96xf32> to vector<2x32xf32>
    %206 = vector.extract_strided_slice %202 {offsets = [0, 32], sizes = [2, 32], strides = [1, 1]} : vector<2x96xf32> to vector<2x32xf32>
    %207 = vector.extract_strided_slice %202 {offsets = [0, 64], sizes = [2, 32], strides = [1, 1]} : vector<2x96xf32> to vector<2x32xf32>
    %208 = arith.mulf %206, %170 : vector<2x32xf32>
    %209 = arith.mulf %205, %204 : vector<2x32xf32>
    %210 = arith.addf %208, %209 : vector<2x32xf32>
    %211 = math.tanh %210 : vector<2x32xf32>
    %212 = arith.mulf %207, %211 : vector<2x32xf32>
    %213 = vector.extract_strided_slice %7 {offsets = [10, 0], sizes = [2, 128], strides = [1, 1]} : vector<16x128xf32> to vector<2x128xf32>
    %214 = vector.extract_strided_slice %193 {offsets = [0, 128], sizes = [2, 128], strides = [1, 1]} : vector<2x256xf32> to vector<2x128xf32>
    %215 = arith.addf %213, %214 : vector<2x128xf32>
    %216 = vector.extract_strided_slice %215 {offsets = [0, 0], sizes = [2, 96], strides = [1, 1]} : vector<2x128xf32> to vector<2x96xf32>
    %217 = arith.negf %216 : vector<2x96xf32>
    %218 = math.exp %217 : vector<2x96xf32>
    %cst_26 = arith.constant 1.000000e+00 : f32
    %219 = vector.broadcast %cst_26 : f32 to vector<2x96xf32>
    %220 = arith.addf %219, %218 : vector<2x96xf32>
    %221 = arith.divf %219, %220 : vector<2x96xf32>
    %222 = vector.extract_strided_slice %215 {offsets = [0, 96], sizes = [2, 32], strides = [1, 1]} : vector<2x128xf32> to vector<2x32xf32>
    %223 = math.tanh %222 : vector<2x32xf32>
    %224 = vector.extract_strided_slice %221 {offsets = [0, 0], sizes = [2, 32], strides = [1, 1]} : vector<2x96xf32> to vector<2x32xf32>
    %225 = vector.extract_strided_slice %221 {offsets = [0, 32], sizes = [2, 32], strides = [1, 1]} : vector<2x96xf32> to vector<2x32xf32>
    %226 = vector.extract_strided_slice %221 {offsets = [0, 64], sizes = [2, 32], strides = [1, 1]} : vector<2x96xf32> to vector<2x32xf32>
    %227 = arith.mulf %225, %189 : vector<2x32xf32>
    %228 = arith.mulf %224, %223 : vector<2x32xf32>
    %229 = arith.addf %227, %228 : vector<2x32xf32>
    %230 = math.tanh %229 : vector<2x32xf32>
    %231 = arith.mulf %226, %230 : vector<2x32xf32>
    %232 = tpu.concatenate %231, %212 in 1 : vector<2x32xf32>, vector<2x32xf32> -> vector<2x64xf32>
    %cst_27 = arith.constant dense<0.000000e+00> : vector<2x256xf32>
    %233 = tpu.matmul %232, %11, %cst_27 {dimension_numbers = #tpu.dot_dimension_numbers<[1], [0], [0], [1], [0, 0, 1, 1], [], []>} : vector<2x64xf32>, vector<64x256xf32>, vector<2x256xf32> -> vector<2x256xf32>
    %234 = vector.extract_strided_slice %233 {offsets = [0, 0], sizes = [2, 128], strides = [1, 1]} : vector<2x256xf32> to vector<2x128xf32>
    %235 = vector.broadcast %8 : vector<1x128xf32> to vector<2x128xf32>
    %236 = arith.addf %234, %235 : vector<2x128xf32>
    %237 = vector.extract_strided_slice %236 {offsets = [0, 0], sizes = [2, 96], strides = [1, 1]} : vector<2x128xf32> to vector<2x96xf32>
    %238 = arith.negf %237 : vector<2x96xf32>
    %239 = math.exp %238 : vector<2x96xf32>
    %cst_28 = arith.constant 1.000000e+00 : f32
    %240 = vector.broadcast %cst_28 : f32 to vector<2x96xf32>
    %241 = arith.addf %240, %239 : vector<2x96xf32>
    %242 = arith.divf %240, %241 : vector<2x96xf32>
    %243 = vector.extract_strided_slice %236 {offsets = [0, 96], sizes = [2, 32], strides = [1, 1]} : vector<2x128xf32> to vector<2x32xf32>
    %244 = math.tanh %243 : vector<2x32xf32>
    %245 = vector.extract_strided_slice %242 {offsets = [0, 0], sizes = [2, 32], strides = [1, 1]} : vector<2x96xf32> to vector<2x32xf32>
    %246 = vector.extract_strided_slice %242 {offsets = [0, 32], sizes = [2, 32], strides = [1, 1]} : vector<2x96xf32> to vector<2x32xf32>
    %247 = vector.extract_strided_slice %242 {offsets = [0, 64], sizes = [2, 32], strides = [1, 1]} : vector<2x96xf32> to vector<2x32xf32>
    %248 = arith.mulf %246, %210 : vector<2x32xf32>
    %249 = arith.mulf %245, %244 : vector<2x32xf32>
    %250 = arith.addf %248, %249 : vector<2x32xf32>
    %251 = math.tanh %250 : vector<2x32xf32>
    %252 = arith.mulf %247, %251 : vector<2x32xf32>
    %253 = vector.extract_strided_slice %7 {offsets = [12, 0], sizes = [2, 128], strides = [1, 1]} : vector<16x128xf32> to vector<2x128xf32>
    %254 = vector.extract_strided_slice %233 {offsets = [0, 128], sizes = [2, 128], strides = [1, 1]} : vector<2x256xf32> to vector<2x128xf32>
    %255 = arith.addf %253, %254 : vector<2x128xf32>
    %256 = vector.extract_strided_slice %255 {offsets = [0, 0], sizes = [2, 96], strides = [1, 1]} : vector<2x128xf32> to vector<2x96xf32>
    %257 = arith.negf %256 : vector<2x96xf32>
    %258 = math.exp %257 : vector<2x96xf32>
    %cst_29 = arith.constant 1.000000e+00 : f32
    %259 = vector.broadcast %cst_29 : f32 to vector<2x96xf32>
    %260 = arith.addf %259, %258 : vector<2x96xf32>
    %261 = arith.divf %259, %260 : vector<2x96xf32>
    %262 = vector.extract_strided_slice %255 {offsets = [0, 96], sizes = [2, 32], strides = [1, 1]} : vector<2x128xf32> to vector<2x32xf32>
    %263 = math.tanh %262 : vector<2x32xf32>
    %264 = vector.extract_strided_slice %261 {offsets = [0, 0], sizes = [2, 32], strides = [1, 1]} : vector<2x96xf32> to vector<2x32xf32>
    %265 = vector.extract_strided_slice %261 {offsets = [0, 32], sizes = [2, 32], strides = [1, 1]} : vector<2x96xf32> to vector<2x32xf32>
    %266 = vector.extract_strided_slice %261 {offsets = [0, 64], sizes = [2, 32], strides = [1, 1]} : vector<2x96xf32> to vector<2x32xf32>
    %267 = arith.mulf %265, %229 : vector<2x32xf32>
    %268 = arith.mulf %264, %263 : vector<2x32xf32>
    %269 = arith.addf %267, %268 : vector<2x32xf32>
    %270 = math.tanh %269 : vector<2x32xf32>
    %271 = arith.mulf %266, %270 : vector<2x32xf32>
    %272 = tpu.concatenate %271, %252 in 1 : vector<2x32xf32>, vector<2x32xf32> -> vector<2x64xf32>
    %cst_30 = arith.constant dense<0.000000e+00> : vector<2x256xf32>
    %273 = tpu.matmul %272, %11, %cst_30 {dimension_numbers = #tpu.dot_dimension_numbers<[1], [0], [0], [1], [0, 0, 1, 1], [], []>} : vector<2x64xf32>, vector<64x256xf32>, vector<2x256xf32> -> vector<2x256xf32>
    %274 = vector.extract_strided_slice %273 {offsets = [0, 0], sizes = [2, 128], strides = [1, 1]} : vector<2x256xf32> to vector<2x128xf32>
    %275 = vector.broadcast %8 : vector<1x128xf32> to vector<2x128xf32>
    %276 = arith.addf %274, %275 : vector<2x128xf32>
    %277 = vector.extract_strided_slice %276 {offsets = [0, 0], sizes = [2, 96], strides = [1, 1]} : vector<2x128xf32> to vector<2x96xf32>
    %278 = arith.negf %277 : vector<2x96xf32>
    %279 = math.exp %278 : vector<2x96xf32>
    %cst_31 = arith.constant 1.000000e+00 : f32
    %280 = vector.broadcast %cst_31 : f32 to vector<2x96xf32>
    %281 = arith.addf %280, %279 : vector<2x96xf32>
    %282 = arith.divf %280, %281 : vector<2x96xf32>
    %283 = vector.extract_strided_slice %276 {offsets = [0, 96], sizes = [2, 32], strides = [1, 1]} : vector<2x128xf32> to vector<2x32xf32>
    %284 = math.tanh %283 : vector<2x32xf32>
    %285 = vector.extract_strided_slice %282 {offsets = [0, 0], sizes = [2, 32], strides = [1, 1]} : vector<2x96xf32> to vector<2x32xf32>
    %286 = vector.extract_strided_slice %282 {offsets = [0, 32], sizes = [2, 32], strides = [1, 1]} : vector<2x96xf32> to vector<2x32xf32>
    %287 = vector.extract_strided_slice %282 {offsets = [0, 64], sizes = [2, 32], strides = [1, 1]} : vector<2x96xf32> to vector<2x32xf32>
    %288 = arith.mulf %286, %250 : vector<2x32xf32>
    %289 = arith.mulf %285, %284 : vector<2x32xf32>
    %290 = arith.addf %288, %289 : vector<2x32xf32>
    %291 = math.tanh %290 : vector<2x32xf32>
    %292 = arith.mulf %287, %291 : vector<2x32xf32>
    %293 = vector.extract_strided_slice %7 {offsets = [14, 0], sizes = [2, 128], strides = [1, 1]} : vector<16x128xf32> to vector<2x128xf32>
    %294 = vector.extract_strided_slice %273 {offsets = [0, 128], sizes = [2, 128], strides = [1, 1]} : vector<2x256xf32> to vector<2x128xf32>
    %295 = arith.addf %293, %294 : vector<2x128xf32>
    %296 = vector.extract_strided_slice %295 {offsets = [0, 0], sizes = [2, 96], strides = [1, 1]} : vector<2x128xf32> to vector<2x96xf32>
    %297 = arith.negf %296 : vector<2x96xf32>
    %298 = math.exp %297 : vector<2x96xf32>
    %cst_32 = arith.constant 1.000000e+00 : f32
    %299 = vector.broadcast %cst_32 : f32 to vector<2x96xf32>
    %300 = arith.addf %299, %298 : vector<2x96xf32>
    %301 = arith.divf %299, %300 : vector<2x96xf32>
    %302 = vector.extract_strided_slice %295 {offsets = [0, 96], sizes = [2, 32], strides = [1, 1]} : vector<2x128xf32> to vector<2x32xf32>
    %303 = math.tanh %302 : vector<2x32xf32>
    %304 = vector.extract_strided_slice %301 {offsets = [0, 0], sizes = [2, 32], strides = [1, 1]} : vector<2x96xf32> to vector<2x32xf32>
    %305 = vector.extract_strided_slice %301 {offsets = [0, 32], sizes = [2, 32], strides = [1, 1]} : vector<2x96xf32> to vector<2x32xf32>
    %306 = vector.extract_strided_slice %301 {offsets = [0, 64], sizes = [2, 32], strides = [1, 1]} : vector<2x96xf32> to vector<2x32xf32>
    %307 = arith.mulf %305, %269 : vector<2x32xf32>
    %308 = arith.mulf %304, %303 : vector<2x32xf32>
    %309 = arith.addf %307, %308 : vector<2x32xf32>
    %310 = math.tanh %309 : vector<2x32xf32>
    %311 = arith.mulf %306, %310 : vector<2x32xf32>
    %312 = tpu.concatenate %311, %292 in 1 : vector<2x32xf32>, vector<2x32xf32> -> vector<2x64xf32>
    %cst_33 = arith.constant dense<0.000000e+00> : vector<2x256xf32>
    %313 = tpu.matmul %312, %11, %cst_33 {dimension_numbers = #tpu.dot_dimension_numbers<[1], [0], [0], [1], [0, 0, 1, 1], [], []>} : vector<2x64xf32>, vector<64x256xf32>, vector<2x256xf32> -> vector<2x256xf32>
    %314 = vector.extract_strided_slice %313 {offsets = [0, 0], sizes = [2, 128], strides = [1, 1]} : vector<2x256xf32> to vector<2x128xf32>
    %315 = vector.broadcast %8 : vector<1x128xf32> to vector<2x128xf32>
    %316 = arith.addf %314, %315 : vector<2x128xf32>
    %317 = vector.extract_strided_slice %316 {offsets = [0, 0], sizes = [2, 96], strides = [1, 1]} : vector<2x128xf32> to vector<2x96xf32>
    %318 = arith.negf %317 : vector<2x96xf32>
    %319 = math.exp %318 : vector<2x96xf32>
    %cst_34 = arith.constant 1.000000e+00 : f32
    %320 = vector.broadcast %cst_34 : f32 to vector<2x96xf32>
    %321 = arith.addf %320, %319 : vector<2x96xf32>
    %322 = arith.divf %320, %321 : vector<2x96xf32>
    %323 = vector.extract_strided_slice %316 {offsets = [0, 96], sizes = [2, 32], strides = [1, 1]} : vector<2x128xf32> to vector<2x32xf32>
    %324 = math.tanh %323 : vector<2x32xf32>
    %325 = vector.extract_strided_slice %322 {offsets = [0, 0], sizes = [2, 32], strides = [1, 1]} : vector<2x96xf32> to vector<2x32xf32>
    %326 = vector.extract_strided_slice %322 {offsets = [0, 32], sizes = [2, 32], strides = [1, 1]} : vector<2x96xf32> to vector<2x32xf32>
    %327 = vector.extract_strided_slice %322 {offsets = [0, 64], sizes = [2, 32], strides = [1, 1]} : vector<2x96xf32> to vector<2x32xf32>
    %328 = arith.mulf %326, %290 : vector<2x32xf32>
    %329 = arith.mulf %325, %324 : vector<2x32xf32>
    %330 = arith.addf %328, %329 : vector<2x32xf32>
    %331 = math.tanh %330 : vector<2x32xf32>
    %332 = arith.mulf %327, %331 : vector<2x32xf32>
    %cst_35 = arith.constant dense<0.000000e+00> : vector<2x128xf32>
    %333 = tpu.matmul %332, %9, %cst_35 {dimension_numbers = #tpu.dot_dimension_numbers<[1], [0], [0], [1], [0, 0, 1, 1], [], []>} : vector<2x32xf32>, vector<32x128xf32>, vector<2x128xf32> -> vector<2x128xf32>
    %334 = vector.broadcast %10 : vector<1x128xf32> to vector<2x128xf32>
    %335 = arith.addf %333, %334 : vector<2x128xf32>
    %c0_36 = arith.constant 0 : index
    %c0_37 = arith.constant 0 : index
    %336 = vector.load %arg3[%c0_36, %c0_37] : memref<2x128xf32, #tpu.memory_space<vmem>>, vector<2x128xf32>
    tpu.vector_store %arg3[%c0_36, %c0_37], %335 {strides = array<i32>} : memref<2x128xf32, #tpu.memory_space<vmem>>, vector<2x128xf32>,
    return
  }
}

</mosaic_0001>

<llo_original>
// kernel: leonard_lstm.1
$region0: #{leonard_lstm.1}
  #allocation0 [shape = 'u32[]', space=smem, size = 0x4, offset = 0x4, fixed_abs, tag = 'smem constant byte address 0x4 - core index']
  #allocation1 [shape = 'u32[72,128]{1,0:T(1,128)}', space=vmem, size = 0x9000, scoped, tag = 'internal scratch']
  %s0 = inlined_call_operand.vmem [shape: s32[16,1], index: 0, kind: input, shape index: {}]
  %s1 = inlined_call_operand.vmem [shape: f32[176,128], index: 1, kind: input, shape index: {}]
  %s2 = inlined_call_operand.vmem [shape: f32[64,256], index: 2, kind: input, shape index: {}]
  %s3 = inlined_call_operand.hbm [shape: f32[2,128], index: 3, kind: output, shape index: {}]
  %s4 = sld [smem:[#allocation0]]
  $region22: #{leonard_lstm.1} parent=0
    _
  %s6 = ssub.s32 1, %s4
  %s7 = scalar_select 0, %s6, %s4
  $region1: #{leonard_lstm.1} parent=0
    #allocation2 [shape = 'u8[1024]{0}', space=vmem, size = 0x400, scoped, tag = 'output window, operand 0, single buffered']
    #allocation3 [shape = 's32[1]{0}', space=sflag, size = 0x4, scoped, tag = 'scoped memory for leonard_lstm.1']
    %8 = vsyncpa [#allocation3], 0
    // Predicated region
    $region2: #{leonard_lstm.1} parent=1 // pred_check
      _
    $region3: #{leonard_lstm.1} parent=1 // pred_check_branch
      %10 = sbr.rel (0) target = $region5
    $region4: #{leonard_lstm.1} parent=1 // pred_region
      _
    $region5: #{leonard_lstm.1} parent=1 // pred_fallthru
      _
    // Predicated region
    $region6: #{leonard_lstm.1} parent=1 // pred_check
      _
    $region7: #{leonard_lstm.1} parent=1 // pred_check_branch
      %12 = sbr.rel (0) target = $region9
    $region8: #{leonard_lstm.1} parent=1 // pred_region
      _
    $region9: #{leonard_lstm.1} parent=1 // pred_fallthru
      _
    // Predicated region
    $region10: #{leonard_lstm.1} parent=1 // pred_check
      _
    $region11: #{leonard_lstm.1} parent=1 // pred_check_branch
      %14 = sbr.rel (0) target = $region13
    $region12: #{leonard_lstm.1} parent=1 // pred_region
      _
    $region13: #{leonard_lstm.1} parent=1 // pred_fallthru
      _
    %v15 = vld [vmem:[%s0] sm:$0xff]
    %v16 = vld [vmem:[%s0 + $0x8] sm:$0xff]
    %v17 = vlaneseq
    %v18 = vand.u32 %v17, 127
    %19 = vset.pattern.permute.xlu0 0
    %20 = vperm.xlu0 %19, %v15
    %v21 = vpop.permute.xlu0 %20
    %22 = vset.pattern.permute.xlu0 0
    %23 = vperm.xlu0 %22, %v16
    %v24 = vpop.permute.xlu0 %23
    %vm25 = vcmp.eq.s32.totalorder %v21, %v18
    %vm26 = vcmp.eq.s32.totalorder %v24, %v18
    %v27 = vsel %vm25, 1, 0
    %v28 = vsel %vm26, 1, 0
    %v29 = vcvt.s32.f32 %v27
    %v30 = vcvt.s32.f32 %v28
    %v31 = vld [vmem:[%s1] sm:$0xff]
    %v32 = vld [vmem:[%s1 + $0x8] sm:$0xff]
    %v33 = vld [vmem:[%s1 + $0x10] sm:$0xff]
    %v34 = vld [vmem:[%s1 + $0x18] sm:$0xff]
    %v35 = vld [vmem:[%s1 + $0x20] sm:$0xff]
    %v36 = vld [vmem:[%s1 + $0x28] sm:$0xff]
    %v37 = vld [vmem:[%s1 + $0x30] sm:$0xff]
    %v38 = vld [vmem:[%s1 + $0x38] sm:$0xff]
    %v39 = vld [vmem:[%s1 + $0x40] sm:$0xff]
    %v40 = vld [vmem:[%s1 + $0x48] sm:$0xff]
    %v41 = vld [vmem:[%s1 + $0x50] sm:$0xff]
    %v42 = vld [vmem:[%s1 + $0x58] sm:$0xff]
    %v43 = vld [vmem:[%s1 + $0x60] sm:$0xff]
    %v44 = vld [vmem:[%s1 + $0x68] sm:$0xff]
    %v45 = vld [vmem:[%s1 + $0x70] sm:$0xff]
    %v46 = vld [vmem:[%s1 + $0x78] sm:$0xff]
    %47 = vmatpush.msra.mxu0 %v46
    %48 = vmatpush.msra.mxu0 %v45
    %49 = vmatpush.msra.mxu0 %v44
    %50 = vmatpush.msra.mxu0 %v43
    %51 = vmatpush.msra.mxu0 %v42
    %52 = vmatpush.msra.mxu0 %v41
    %53 = vmatpush.msra.mxu0 %v40
    %54 = vmatpush.msra.mxu0 %v39
    %55 = vmatpush.msra.mxu0 %v38
    %56 = vmatpush.msra.mxu0 %v37
    %57 = vmatpush.msra.mxu0 %v36
    %58 = vmatpush.msra.mxu0 %v35
    %59 = vmatpush.msra.mxu0 %v34
    %60 = vmatpush.msra.mxu0 %v33
    %61 = vmatpush.msra.mxu0 %v32
    %62 = vmatpush.msra.mxu0 %v31
    %63 = vmatmul.f32.gmra.mxu0 %v29
    %v64 = vpop.f32.mrf.mxu0
    %v65 = vadd.f32 0.0, %v64
    %66 = vmatmul.f32.gmra.mxu0 %v30
    %v67 = vpop.f32.mrf.mxu0
    %v68 = vadd.f32 0.0, %v67
    %69 = vdwg.mxu0
    %v70 = vld [vmem:[%s1 + $0x80] sm:$0x1]
    %v71 = vld [vmem:[%s1 + $0x88] sm:$0xff]
    %v72 = vld [vmem:[%s1 + $0x90] sm:$0xff]
    %v73 = vld [vmem:[%s1 + $0x98] sm:$0xff]
    %v74 = vld [vmem:[%s1 + $0xa0] sm:$0xff]
    %v75 = vld [vmem:[%s1 + $0xa8] sm:$0x1]
    %v76 = vld [vmem:[%s2] sm:$0xff]
    %v77 = vld [vmem:[%s2 + $0x8] sm:$0xff]
    %v78 = vld [vmem:[%s2 + $0x10] sm:$0xff]
    %v79 = vld [vmem:[%s2 + $0x18] sm:$0xff]
    %v80 = vld [vmem:[%s2 + $0x20] sm:$0xff]
    %v81 = vld [vmem:[%s2 + $0x28] sm:$0xff]
    %v82 = vld [vmem:[%s2 + $0x30] sm:$0xff]
    %v83 = vld [vmem:[%s2 + $0x38] sm:$0xff]
    %v84 = vld [vmem:[%s2 + $0x40] sm:$0xff]
    %v85 = vld [vmem:[%s2 + $0x48] sm:$0xff]
    %v86 = vld [vmem:[%s2 + $0x50] sm:$0xff]
    %v87 = vld [vmem:[%s2 + $0x58] sm:$0xff]
    %v88 = vld [vmem:[%s2 + $0x60] sm:$0xff]
    %v89 = vld [vmem:[%s2 + $0x68] sm:$0xff]
    %v90 = vld [vmem:[%s2 + $0x70] sm:$0xff]
    %v91 = vld [vmem:[%s2 + $0x78] sm:$0xff]
    %v92 = vxor.u32 %v65, 2147483648
    %v93 = vmul.f32 %v92, 1.442695
    %v94 = vpow.pop %v93
    %v95 = vadd.f32 %v94, 1.0
    %v96 = vrcp.pop %v95
    %v97 = vmul.f32 %v95, %v96
    %v98 = vsub.f32 1.0, %v97
    %v99 = vmul.f32 %v96, %v98
    %v100 = vadd.f32 %v96, %v99
    %vm101 = vweird.f32 %v95
    %vm102 = vweird.f32 %v96
    %vm103 = vmor %vm101, %vm102
    %v104 = vsel %vm103, %v96, %v100
    %v105 = vand.u32 2147483647, %v95
    %vm106 = vcmp.eq.f32.partialorder %v105, 8.507059e+37
    %v107 = vand.u32 %v95, 2147483648
    %v108 = vor.u32 1.1754944e-38, %v107
    %v109 = vsel %vm106, %v108, %v104
    %v110 = vmul.f32 1.0, %v109
    %v111 = vtanh.pop %v65
    %v112 = vmul.f32 %v110, 0.0
    %114 = vrot.lane.b32.xlu0 %v111, 32
    %v115 = vpop.permute.xlu0 %114
    %v117 = vmul.f32 %v110, %v115
    %119 = vrot.lane.b32.xlu0 %v117, 32
    %v120 = vpop.permute.xlu0 %119
    %v122 = vadd.f32 %v112, %v120
    %v123 = vtanh.pop %v122
    %125 = vrot.lane.b32.xlu0 %v123, 32
    %v126 = vpop.permute.xlu0 %125
    %v128 = vmul.f32 %v110, %v126
    %130 = vrot.lane.b32.xlu0 %v128, 64
    %v131 = vpop.permute.xlu0 %130
    %vm133 = vcmask 261120
    %v134 = vsel %vm133, %v131, 0.0
    %vm135 = vcmask 523264
    %v137 = vsel %vm135, %v134, 0
    %139 = vmatpush.msra.mxu0 0.0
    %140 = vmatpush.msra.mxu0 0.0
    %141 = vmatpush.msra.mxu0 0.0
    %142 = vmatpush.msra.mxu0 0.0
    %143 = vmatpush.msra.mxu0 0.0
    %144 = vmatpush.msra.mxu0 0.0
    %145 = vmatpush.msra.mxu0 0.0
    %146 = vmatpush.msra.mxu0 0.0
    %147 = vmatpush.msra.mxu0 %v90
    %148 = vmatpush.msra.mxu0 %v88
    %149 = vmatpush.msra.mxu0 %v86
    %150 = vmatpush.msra.mxu0 %v84
    %151 = vmatpush.msra.mxu0 %v82
    %152 = vmatpush.msra.mxu0 %v80
    %153 = vmatpush.msra.mxu0 %v78
    %154 = vmatpush.msra.mxu0 %v76
    %155 = vmatmul.f32.gmra.mxu0 %v137
    %v156 = vpop.f32.mrf.mxu0
    %v157 = vadd.f32 0.0, %v156
    %158 = vdwg.mxu0
    %159 = vmatpush.msra.mxu0 0.0
    %160 = vmatpush.msra.mxu0 0.0
    %161 = vmatpush.msra.mxu0 0.0
    %162 = vmatpush.msra.mxu0 0.0
    %163 = vmatpush.msra.mxu0 0.0
    %164 = vmatpush.msra.mxu0 0.0
    %165 = vmatpush.msra.mxu0 0.0
    %166 = vmatpush.msra.mxu0 0.0
    %167 = vmatpush.msra.mxu0 %v91
    %168 = vmatpush.msra.mxu0 %v89
    %169 = vmatpush.msra.mxu0 %v87
    %170 = vmatpush.msra.mxu0 %v85
    %171 = vmatpush.msra.mxu0 %v83
    %172 = vmatpush.msra.mxu0 %v81
    %173 = vmatpush.msra.mxu0 %v79
    %174 = vmatpush.msra.mxu0 %v77
    %175 = vmatmul.f32.gmra.mxu0 %v137
    %v176 = vpop.f32.mrf.mxu0
    %v177 = vadd.f32 0.0, %v176
    %178 = vdwg.mxu0
    %v179 = vperm.slane %v70, 0
    %v180 = vadd.f32 %v157, %v179
    %v181 = vxor.u32 %v180, 2147483648
    %v182 = vmul.f32 %v181, 1.442695
    %v183 = vpow.pop %v182
    %v184 = vadd.f32 %v183, 1.0
    %v185 = vrcp.pop %v184
    %v186 = vmul.f32 %v184, %v185
    %v187 = vsub.f32 1.0, %v186
    %v188 = vmul.f32 %v185, %v187
    %v189 = vadd.f32 %v185, %v188
    %vm190 = vweird.f32 %v184
    %vm191 = vweird.f32 %v185
    %vm192 = vmor %vm190, %vm191
    %v193 = vsel %vm192, %v185, %v189
    %v194 = vand.u32 2147483647, %v184
    %vm195 = vcmp.eq.f32.partialorder %v194, 8.507059e+37
    %v196 = vand.u32 %v184, 2147483648
    %v197 = vor.u32 1.1754944e-38, %v196
    %v198 = vsel %vm195, %v197, %v193
    %v199 = vmul.f32 1.0, %v198
    %v200 = vtanh.pop %v180
    %v201 = vmul.f32 %v199, 0.0
    %203 = vrot.lane.b32.xlu0 %v200, 32
    %v204 = vpop.permute.xlu0 %203
    %v206 = vmul.f32 %v199, %v204
    %208 = vrot.lane.b32.xlu0 %v206, 32
    %v209 = vpop.permute.xlu0 %208
    %v211 = vadd.f32 %v201, %v209
    %v212 = vtanh.pop %v211
    %214 = vrot.lane.b32.xlu0 %v212, 32
    %v215 = vpop.permute.xlu0 %214
    %v217 = vmul.f32 %v199, %v215
    %v219 = vrot.slane %v177, 6
    %v221 = vadd.f32 %v65, %v219
    %v222 = vxor.u32 %v221, 2147483648
    %v223 = vmul.f32 %v222, 1.442695
    %v224 = vpow.pop %v223
    %v225 = vadd.f32 %v224, 1.0
    %v226 = vrcp.pop %v225
    %v227 = vmul.f32 %v225, %v226
    %v228 = vsub.f32 1.0, %v227
    %v229 = vmul.f32 %v226, %v228
    %v230 = vadd.f32 %v226, %v229
    %vm231 = vweird.f32 %v225
    %vm232 = vweird.f32 %v226
    %vm233 = vmor %vm231, %vm232
    %v234 = vsel %vm233, %v226, %v230
    %v235 = vand.u32 2147483647, %v225
    %vm236 = vcmp.eq.f32.partialorder %v235, 8.507059e+37
    %v237 = vand.u32 %v225, 2147483648
    %v238 = vor.u32 1.1754944e-38, %v237
    %v239 = vsel %vm236, %v238, %v234
    %v240 = vmul.f32 1.0, %v239
    %v241 = vtanh.pop %v221
    %v243 = vrot.slane %v122, 6
    %v245 = vmul.f32 %v240, %v243
    %247 = vrot.lane.b32.xlu0 %v241, 32
    %v248 = vpop.permute.xlu0 %247
    %v250 = vmul.f32 %v240, %v248
    %252 = vrot.lane.b32.xlu0 %v250, 32
    %v253 = vpop.permute.xlu0 %252
    %v255 = vadd.f32 %v245, %v253
    %v256 = vtanh.pop %v255
    %258 = vrot.lane.b32.xlu0 %v256, 32
    %v259 = vpop.permute.xlu0 %258
    %v261 = vmul.f32 %v240, %v259
    %263 = vrot.lane.b32.xlu0 %v261, 64
    %v264 = vpop.permute.xlu0 %263
    %v267 = vrot.slane %v217, 6
    %268 = vrot.lane.b32.xlu0 %v267, 96
    %v269 = vpop.permute.xlu0 %268
    %v271 = vsel %vm133, %v264, %v269
    %v273 = vrot.slane %v271, 2
    %v274 = vsel %vm135, %v273, 0
    %276 = vmatpush.msra.mxu0 0.0
    %277 = vmatpush.msra.mxu0 0.0
    %278 = vmatpush.msra.mxu0 0.0
    %279 = vmatpush.msra.mxu0 0.0
    %280 = vmatpush.msra.mxu0 0.0
    %281 = vmatpush.msra.mxu0 0.0
    %282 = vmatpush.msra.mxu0 0.0
    %283 = vmatpush.msra.mxu0 0.0
    %284 = vmatpush.msra.mxu0 %v90
    %285 = vmatpush.msra.mxu0 %v88
    %286 = vmatpush.msra.mxu0 %v86
    %287 = vmatpush.msra.mxu0 %v84
    %288 = vmatpush.msra.mxu0 %v82
    %289 = vmatpush.msra.mxu0 %v80
    %290 = vmatpush.msra.mxu0 %v78
    %291 = vmatpush.msra.mxu0 %v76
    %292 = vmatmul.f32.gmra.mxu0 %v274
    %v293 = vpop.f32.mrf.mxu0
    %v294 = vadd.f32 0.0, %v293
    %295 = vdwg.mxu0
    %296 = vmatpush.msra.mxu0 0.0
    %297 = vmatpush.msra.mxu0 0.0
    %298 = vmatpush.msra.mxu0 0.0
    %299 = vmatpush.msra.mxu0 0.0
    %300 = vmatpush.msra.mxu0 0.0
    %301 = vmatpush.msra.mxu0 0.0
    %302 = vmatpush.msra.mxu0 0.0
    %303 = vmatpush.msra.mxu0 0.0
    %304 = vmatpush.msra.mxu0 %v91
    %305 = vmatpush.msra.mxu0 %v89
    %306 = vmatpush.msra.mxu0 %v87
    %307 = vmatpush.msra.mxu0 %v85
    %308 = vmatpush.msra.mxu0 %v83
    %309 = vmatpush.msra.mxu0 %v81
    %310 = vmatpush.msra.mxu0 %v79
    %311 = vmatpush.msra.mxu0 %v77
    %312 = vmatmul.f32.gmra.mxu0 %v274
    %v313 = vpop.f32.mrf.mxu0
    %v314 = vadd.f32 0.0, %v313
    %315 = vdwg.mxu0
    %v316 = vadd.f32 %v294, %v179
    %v317 = vxor.u32 %v316, 2147483648
    %v318 = vmul.f32 %v317, 1.442695
    %v319 = vpow.pop %v318
    %v320 = vadd.f32 %v319, 1.0
    %v321 = vrcp.pop %v320
    %v322 = vmul.f32 %v320, %v321
    %v323 = vsub.f32 1.0, %v322
    %v324 = vmul.f32 %v321, %v323
    %v325 = vadd.f32 %v321, %v324
    %vm326 = vweird.f32 %v320
    %vm327 = vweird.f32 %v321
    %vm328 = vmor %vm326, %vm327
    %v329 = vsel %vm328, %v321, %v325
    %v330 = vand.u32 2147483647, %v320
    %vm331 = vcmp.eq.f32.partialorder %v330, 8.507059e+37
    %v332 = vand.u32 %v320, 2147483648
    %v333 = vor.u32 1.1754944e-38, %v332
    %v334 = vsel %vm331, %v333, %v329
    %v335 = vmul.f32 1.0, %v334
    %v336 = vtanh.pop %v316
    %v337 = vmul.f32 %v335, %v211
    %339 = vrot.lane.b32.xlu0 %v336, 32
    %v340 = vpop.permute.xlu0 %339
    %v342 = vmul.f32 %v335, %v340
    %344 = vrot.lane.b32.xlu0 %v342, 32
    %v345 = vpop.permute.xlu0 %344
    %v347 = vadd.f32 %v337, %v345
    %v348 = vtanh.pop %v347
    %350 = vrot.lane.b32.xlu0 %v348, 32
    %v351 = vpop.permute.xlu0 %350
    %v353 = vmul.f32 %v335, %v351
    %v355 = vrot.slane %v314, 4
    %v357 = vadd.f32 %v65, %v355
    %v358 = vxor.u32 %v357, 2147483648
    %v359 = vmul.f32 %v358, 1.442695
    %v360 = vpow.pop %v359
    %v361 = vadd.f32 %v360, 1.0
    %v362 = vrcp.pop %v361
    %v363 = vmul.f32 %v361, %v362
    %v364 = vsub.f32 1.0, %v363
    %v365 = vmul.f32 %v362, %v364
    %v366 = vadd.f32 %v362, %v365
    %vm367 = vweird.f32 %v361
    %vm368 = vweird.f32 %v362
    %vm369 = vmor %vm367, %vm368
    %v370 = vsel %vm369, %v362, %v366
    %v371 = vand.u32 2147483647, %v361
    %vm372 = vcmp.eq.f32.partialorder %v371, 8.507059e+37
    %v373 = vand.u32 %v361, 2147483648
    %v374 = vor.u32 1.1754944e-38, %v373
    %v375 = vsel %vm372, %v374, %v370
    %v376 = vmul.f32 1.0, %v375
    %v377 = vtanh.pop %v357
    %v379 = vrot.slane %v255, 6
    %v381 = vmul.f32 %v376, %v379
    %383 = vrot.lane.b32.xlu0 %v377, 32
    %v384 = vpop.permute.xlu0 %383
    %v386 = vmul.f32 %v376, %v384
    %388 = vrot.lane.b32.xlu0 %v386, 32
    %v389 = vpop.permute.xlu0 %388
    %v391 = vadd.f32 %v381, %v389
    %v392 = vtanh.pop %v391
    %394 = vrot.lane.b32.xlu0 %v392, 32
    %v395 = vpop.permute.xlu0 %394
    %v397 = vmul.f32 %v376, %v395
    %399 = vrot.lane.b32.xlu0 %v397, 64
    %v400 = vpop.permute.xlu0 %399
    %v403 = vrot.slane %v353, 4
    %404 = vrot.lane.b32.xlu0 %v403, 96
    %v405 = vpop.permute.xlu0 %404
    %v407 = vsel %vm133, %v400, %v405
    %v409 = vrot.slane %v407, 4
    %v410 = vsel %vm135, %v409, 0
    %412 = vmatpush.msra.mxu0 0.0
    %413 = vmatpush.msra.mxu0 0.0
    %414 = vmatpush.msra.mxu0 0.0
    %415 = vmatpush.msra.mxu0 0.0
    %416 = vmatpush.msra.mxu0 0.0
    %417 = vmatpush.msra.mxu0 0.0
    %418 = vmatpush.msra.mxu0 0.0
    %419 = vmatpush.msra.mxu0 0.0
    %420 = vmatpush.msra.mxu0 %v90
    %421 = vmatpush.msra.mxu0 %v88
    %422 = vmatpush.msra.mxu0 %v86
    %423 = vmatpush.msra.mxu0 %v84
    %424 = vmatpush.msra.mxu0 %v82
    %425 = vmatpush.msra.mxu0 %v80
    %426 = vmatpush.msra.mxu0 %v78
    %427 = vmatpush.msra.mxu0 %v76
    %428 = vmatmul.f32.gmra.mxu0 %v410
    %v429 = vpop.f32.mrf.mxu0
    %v430 = vadd.f32 0.0, %v429
    %431 = vdwg.mxu0
    %432 = vmatpush.msra.mxu0 0.0
    %433 = vmatpush.msra.mxu0 0.0
    %434 = vmatpush.msra.mxu0 0.0
    %435 = vmatpush.msra.mxu0 0.0
    %436 = vmatpush.msra.mxu0 0.0
    %437 = vmatpush.msra.mxu0 0.0
    %438 = vmatpush.msra.mxu0 0.0
    %439 = vmatpush.msra.mxu0 0.0
    %440 = vmatpush.msra.mxu0 %v91
    %441 = vmatpush.msra.mxu0 %v89
    %442 = vmatpush.msra.mxu0 %v87
    %443 = vmatpush.msra.mxu0 %v85
    %444 = vmatpush.msra.mxu0 %v83
    %445 = vmatpush.msra.mxu0 %v81
    %446 = vmatpush.msra.mxu0 %v79
    %447 = vmatpush.msra.mxu0 %v77
    %448 = vmatmul.f32.gmra.mxu0 %v410
    %v449 = vpop.f32.mrf.mxu0
    %v450 = vadd.f32 0.0, %v449
    %451 = vdwg.mxu0
    %v452 = vadd.f32 %v430, %v179
    %v453 = vxor.u32 %v452, 2147483648
    %v454 = vmul.f32 %v453, 1.442695
    %v455 = vpow.pop %v454
    %v456 = vadd.f32 %v455, 1.0
    %v457 = vrcp.pop %v456
    %v458 = vmul.f32 %v456, %v457
    %v459 = vsub.f32 1.0, %v458
    %v460 = vmul.f32 %v457, %v459
    %v461 = vadd.f32 %v457, %v460
    %vm462 = vweird.f32 %v456
    %vm463 = vweird.f32 %v457
    %vm464 = vmor %vm462, %vm463
    %v465 = vsel %vm464, %v457, %v461
    %v466 = vand.u32 2147483647, %v456
    %vm467 = vcmp.eq.f32.partialorder %v466, 8.507059e+37
    %v468 = vand.u32 %v456, 2147483648
    %v469 = vor.u32 1.1754944e-38, %v468
    %v470 = vsel %vm467, %v469, %v465
    %v471 = vmul.f32 1.0, %v470
    %v472 = vtanh.pop %v452
    %v473 = vmul.f32 %v471, %v347
    %475 = vrot.lane.b32.xlu0 %v472, 32
    %v476 = vpop.permute.xlu0 %475
    %v478 = vmul.f32 %v471, %v476
    %480 = vrot.lane.b32.xlu0 %v478, 32
    %v481 = vpop.permute.xlu0 %480
    %v483 = vadd.f32 %v473, %v481
    %v484 = vtanh.pop %v483
    %486 = vrot.lane.b32.xlu0 %v484, 32
    %v487 = vpop.permute.xlu0 %486
    %v489 = vmul.f32 %v471, %v487
    %v491 = vrot.slane %v450, 2
    %v493 = vadd.f32 %v65, %v491
    %v494 = vxor.u32 %v493, 2147483648
    %v495 = vmul.f32 %v494, 1.442695
    %v496 = vpow.pop %v495
    %v497 = vadd.f32 %v496, 1.0
    %v498 = vrcp.pop %v497
    %v499 = vmul.f32 %v497, %v498
    %v500 = vsub.f32 1.0, %v499
    %v501 = vmul.f32 %v498, %v500
    %v502 = vadd.f32 %v498, %v501
    %vm503 = vweird.f32 %v497
    %vm504 = vweird.f32 %v498
    %vm505 = vmor %vm503, %vm504
    %v506 = vsel %vm505, %v498, %v502
    %v507 = vand.u32 2147483647, %v497
    %vm508 = vcmp.eq.f32.partialorder %v507, 8.507059e+37
    %v509 = vand.u32 %v497, 2147483648
    %v510 = vor.u32 1.1754944e-38, %v509
    %v511 = vsel %vm508, %v510, %v506
    %v512 = vmul.f32 1.0, %v511
    %v513 = vtanh.pop %v493
    %v515 = vrot.slane %v391, 6
    %v517 = vmul.f32 %v512, %v515
    %519 = vrot.lane.b32.xlu0 %v513, 32
    %v520 = vpop.permute.xlu0 %519
    %v522 = vmul.f32 %v512, %v520
    %524 = vrot.lane.b32.xlu0 %v522, 32
    %v525 = vpop.permute.xlu0 %524
    %v527 = vadd.f32 %v517, %v525
    %v528 = vtanh.pop %v527
    %530 = vrot.lane.b32.xlu0 %v528, 32
    %v531 = vpop.permute.xlu0 %530
    %v533 = vmul.f32 %v512, %v531
    %535 = vrot.lane.b32.xlu0 %v533, 64
    %v536 = vpop.permute.xlu0 %535
    %v539 = vrot.slane %v489, 2
    %540 = vrot.lane.b32.xlu0 %v539, 96
    %v541 = vpop.permute.xlu0 %540
    %v543 = vsel %vm133, %v536, %v541
    %v545 = vrot.slane %v543, 6
    %v546 = vsel %vm135, %v545, 0
    %548 = vmatpush.msra.mxu0 0.0
    %549 = vmatpush.msra.mxu0 0.0
    %550 = vmatpush.msra.mxu0 0.0
    %551 = vmatpush.msra.mxu0 0.0
    %552 = vmatpush.msra.mxu0 0.0
    %553 = vmatpush.msra.mxu0 0.0
    %554 = vmatpush.msra.mxu0 0.0
    %555 = vmatpush.msra.mxu0 0.0
    %556 = vmatpush.msra.mxu0 %v90
    %557 = vmatpush.msra.mxu0 %v88
    %558 = vmatpush.msra.mxu0 %v86
    %559 = vmatpush.msra.mxu0 %v84
    %560 = vmatpush.msra.mxu0 %v82
    %561 = vmatpush.msra.mxu0 %v80
    %562 = vmatpush.msra.mxu0 %v78
    %563 = vmatpush.msra.mxu0 %v76
    %564 = vmatmul.f32.gmra.mxu0 %v546
    %v565 = vpop.f32.mrf.mxu0
    %v566 = vadd.f32 0.0, %v565
    %567 = vdwg.mxu0
    %568 = vmatpush.msra.mxu0 0.0
    %569 = vmatpush.msra.mxu0 0.0
    %570 = vmatpush.msra.mxu0 0.0
    %571 = vmatpush.msra.mxu0 0.0
    %572 = vmatpush.msra.mxu0 0.0
    %573 = vmatpush.msra.mxu0 0.0
    %574 = vmatpush.msra.mxu0 0.0
    %575 = vmatpush.msra.mxu0 0.0
    %576 = vmatpush.msra.mxu0 %v91
    %577 = vmatpush.msra.mxu0 %v89
    %578 = vmatpush.msra.mxu0 %v87
    %579 = vmatpush.msra.mxu0 %v85
    %580 = vmatpush.msra.mxu0 %v83
    %581 = vmatpush.msra.mxu0 %v81
    %582 = vmatpush.msra.mxu0 %v79
    %583 = vmatpush.msra.mxu0 %v77
    %584 = vmatmul.f32.gmra.mxu0 %v546
    %v585 = vpop.f32.mrf.mxu0
    %v586 = vadd.f32 0.0, %v585
    %587 = vdwg.mxu0
    %v588 = vadd.f32 %v566, %v179
    %v589 = vxor.u32 %v588, 2147483648
    %v590 = vmul.f32 %v589, 1.442695
    %v591 = vpow.pop %v590
    %v592 = vadd.f32 %v591, 1.0
    %v593 = vrcp.pop %v592
    %v594 = vmul.f32 %v592, %v593
    %v595 = vsub.f32 1.0, %v594
    %v596 = vmul.f32 %v593, %v595
    %v597 = vadd.f32 %v593, %v596
    %vm598 = vweird.f32 %v592
    %vm599 = vweird.f32 %v593
    %vm600 = vmor %vm598, %vm599
    %v601 = vsel %vm600, %v593, %v597
    %v602 = vand.u32 2147483647, %v592
    %vm603 = vcmp.eq.f32.partialorder %v602, 8.507059e+37
    %v604 = vand.u32 %v592, 2147483648
    %v605 = vor.u32 1.1754944e-38, %v604
    %v606 = vsel %vm603, %v605, %v601
    %v607 = vmul.f32 1.0, %v606
    %v608 = vtanh.pop %v588
    %v609 = vmul.f32 %v607, %v483
    %611 = vrot.lane.b32.xlu0 %v608, 32
    %v612 = vpop.permute.xlu0 %611
    %v614 = vmul.f32 %v607, %v612
    %616 = vrot.lane.b32.xlu0 %v614, 32
    %v617 = vpop.permute.xlu0 %616
    %v619 = vadd.f32 %v609, %v617
    %v620 = vtanh.pop %v619
    %622 = vrot.lane.b32.xlu0 %v620, 32
    %v623 = vpop.permute.xlu0 %622
    %v625 = vmul.f32 %v607, %v623
    %v626 = vadd.f32 %v68, %v586
    %v627 = vxor.u32 %v626, 2147483648
    %v628 = vmul.f32 %v627, 1.442695
    %v629 = vpow.pop %v628
    %v630 = vadd.f32 %v629, 1.0
    %v631 = vrcp.pop %v630
    %v632 = vmul.f32 %v630, %v631
    %v633 = vsub.f32 1.0, %v632
    %v634 = vmul.f32 %v631, %v633
    %v635 = vadd.f32 %v631, %v634
    %vm636 = vweird.f32 %v630
    %vm637 = vweird.f32 %v631
    %vm638 = vmor %vm636, %vm637
    %v639 = vsel %vm638, %v631, %v635
    %v640 = vand.u32 2147483647, %v630
    %vm641 = vcmp.eq.f32.partialorder %v640, 8.507059e+37
    %v642 = vand.u32 %v630, 2147483648
    %v643 = vor.u32 1.1754944e-38, %v642
    %v644 = vsel %vm641, %v643, %v639
    %v645 = vmul.f32 1.0, %v644
    %v646 = vtanh.pop %v626
    %v648 = vrot.slane %v527, 6
    %v650 = vmul.f32 %v645, %v648
    %652 = vrot.lane.b32.xlu0 %v646, 32
    %v653 = vpop.permute.xlu0 %652
    %v655 = vmul.f32 %v645, %v653
    %657 = vrot.lane.b32.xlu0 %v655, 32
    %v658 = vpop.permute.xlu0 %657
    %v660 = vadd.f32 %v650, %v658
    %v661 = vtanh.pop %v660
    %663 = vrot.lane.b32.xlu0 %v661, 32
    %v664 = vpop.permute.xlu0 %663
    %v666 = vmul.f32 %v645, %v664
    %668 = vrot.lane.b32.xlu0 %v666, 64
    %v669 = vpop.permute.xlu0 %668
    %672 = vrot.lane.b32.xlu0 %v625, 96
    %v673 = vpop.permute.xlu0 %672
    %v675 = vsel %vm133, %v669, %v673
    %v677 = vsel %vm135, %v675, 0
    %679 = vmatpush.msra.mxu0 0.0
    %680 = vmatpush.msra.mxu0 0.0
    %681 = vmatpush.msra.mxu0 0.0
    %682 = vmatpush.msra.mxu0 0.0
    %683 = vmatpush.msra.mxu0 0.0
    %684 = vmatpush.msra.mxu0 0.0
    %685 = vmatpush.msra.mxu0 0.0
    %686 = vmatpush.msra.mxu0 0.0
    %687 = vmatpush.msra.mxu0 %v90
    %688 = vmatpush.msra.mxu0 %v88
    %689 = vmatpush.msra.mxu0 %v86
    %690 = vmatpush.msra.mxu0 %v84
    %691 = vmatpush.msra.mxu0 %v82
    %692 = vmatpush.msra.mxu0 %v80
    %693 = vmatpush.msra.mxu0 %v78
    %694 = vmatpush.msra.mxu0 %v76
    %695 = vmatmul.f32.gmra.mxu0 %v677
    %v696 = vpop.f32.mrf.mxu0
    %v697 = vadd.f32 0.0, %v696
    %698 = vdwg.mxu0
    %699 = vmatpush.msra.mxu0 0.0
    %700 = vmatpush.msra.mxu0 0.0
    %701 = vmatpush.msra.mxu0 0.0
    %702 = vmatpush.msra.mxu0 0.0
    %703 = vmatpush.msra.mxu0 0.0
    %704 = vmatpush.msra.mxu0 0.0
    %705 = vmatpush.msra.mxu0 0.0
    %706 = vmatpush.msra.mxu0 0.0
    %707 = vmatpush.msra.mxu0 %v91
    %708 = vmatpush.msra.mxu0 %v89
    %709 = vmatpush.msra.mxu0 %v87
    %710 = vmatpush.msra.mxu0 %v85
    %711 = vmatpush.msra.mxu0 %v83
    %712 = vmatpush.msra.mxu0 %v81
    %713 = vmatpush.msra.mxu0 %v79
    %714 = vmatpush.msra.mxu0 %v77
    %715 = vmatmul.f32.gmra.mxu0 %v677
    %v716 = vpop.f32.mrf.mxu0
    %v717 = vadd.f32 0.0, %v716
    %718 = vdwg.mxu0
    %v719 = vadd.f32 %v697, %v179
    %v720 = vxor.u32 %v719, 2147483648
    %v721 = vmul.f32 %v720, 1.442695
    %v722 = vpow.pop %v721
    %v723 = vadd.f32 %v722, 1.0
    %v724 = vrcp.pop %v723
    %v725 = vmul.f32 %v723, %v724
    %v726 = vsub.f32 1.0, %v725
    %v727 = vmul.f32 %v724, %v726
    %v728 = vadd.f32 %v724, %v727
    %vm729 = vweird.f32 %v723
    %vm730 = vweird.f32 %v724
    %vm731 = vmor %vm729, %vm730
    %v732 = vsel %vm731, %v724, %v728
    %v733 = vand.u32 2147483647, %v723
    %vm734 = vcmp.eq.f32.partialorder %v733, 8.507059e+37
    %v735 = vand.u32 %v723, 2147483648
    %v736 = vor.u32 1.1754944e-38, %v735
    %v737 = vsel %vm734, %v736, %v732
    %v738 = vmul.f32 1.0, %v737
    %v739 = vtanh.pop %v719
    %v740 = vmul.f32 %v738, %v619
    %742 = vrot.lane.b32.xlu0 %v739, 32
    %v743 = vpop.permute.xlu0 %742
    %v745 = vmul.f32 %v738, %v743
    %747 = vrot.lane.b32.xlu0 %v745, 32
    %v748 = vpop.permute.xlu0 %747
    %v750 = vadd.f32 %v740, %v748
    %v751 = vtanh.pop %v750
    %753 = vrot.lane.b32.xlu0 %v751, 32
    %v754 = vpop.permute.xlu0 %753
    %v756 = vmul.f32 %v738, %v754
    %v758 = vrot.slane %v717, 6
    %v760 = vadd.f32 %v68, %v758
    %v761 = vxor.u32 %v760, 2147483648
    %v762 = vmul.f32 %v761, 1.442695
    %v763 = vpow.pop %v762
    %v764 = vadd.f32 %v763, 1.0
    %v765 = vrcp.pop %v764
    %v766 = vmul.f32 %v764, %v765
    %v767 = vsub.f32 1.0, %v766
    %v768 = vmul.f32 %v765, %v767
    %v769 = vadd.f32 %v765, %v768
    %vm770 = vweird.f32 %v764
    %vm771 = vweird.f32 %v765
    %vm772 = vmor %vm770, %vm771
    %v773 = vsel %vm772, %v765, %v769
    %v774 = vand.u32 2147483647, %v764
    %vm775 = vcmp.eq.f32.partialorder %v774, 8.507059e+37
    %v776 = vand.u32 %v764, 2147483648
    %v777 = vor.u32 1.1754944e-38, %v776
    %v778 = vsel %vm775, %v777, %v773
    %v779 = vmul.f32 1.0, %v778
    %v780 = vtanh.pop %v760
    %v782 = vrot.slane %v660, 6
    %v784 = vmul.f32 %v779, %v782
    %786 = vrot.lane.b32.xlu0 %v780, 32
    %v787 = vpop.permute.xlu0 %786
    %v789 = vmul.f32 %v779, %v787
    %791 = vrot.lane.b32.xlu0 %v789, 32
    %v792 = vpop.permute.xlu0 %791
    %v794 = vadd.f32 %v784, %v792
    %v795 = vtanh.pop %v794
    %797 = vrot.lane.b32.xlu0 %v795, 32
    %v798 = vpop.permute.xlu0 %797
    %v800 = vmul.f32 %v779, %v798
    %802 = vrot.lane.b32.xlu0 %v800, 64
    %v803 = vpop.permute.xlu0 %802
    %v806 = vrot.slane %v756, 6
    %807 = vrot.lane.b32.xlu0 %v806, 96
    %v808 = vpop.permute.xlu0 %807
    %v810 = vsel %vm133, %v803, %v808
    %v812 = vrot.slane %v810, 2
    %v813 = vsel %vm135, %v812, 0
    %815 = vmatpush.msra.mxu0 0.0
    %816 = vmatpush.msra.mxu0 0.0
    %817 = vmatpush.msra.mxu0 0.0
    %818 = vmatpush.msra.mxu0 0.0
    %819 = vmatpush.msra.mxu0 0.0
    %820 = vmatpush.msra.mxu0 0.0
    %821 = vmatpush.msra.mxu0 0.0
    %822 = vmatpush.msra.mxu0 0.0
    %823 = vmatpush.msra.mxu0 %v90
    %824 = vmatpush.msra.mxu0 %v88
    %825 = vmatpush.msra.mxu0 %v86
    %826 = vmatpush.msra.mxu0 %v84
    %827 = vmatpush.msra.mxu0 %v82
    %828 = vmatpush.msra.mxu0 %v80
    %829 = vmatpush.msra.mxu0 %v78
    %830 = vmatpush.msra.mxu0 %v76
    %831 = vmatmul.f32.gmra.mxu0 %v813
    %v832 = vpop.f32.mrf.mxu0
    %v833 = vadd.f32 0.0, %v832
    %834 = vdwg.mxu0
    %835 = vmatpush.msra.mxu0 0.0
    %836 = vmatpush.msra.mxu0 0.0
    %837 = vmatpush.msra.mxu0 0.0
    %838 = vmatpush.msra.mxu0 0.0
    %839 = vmatpush.msra.mxu0 0.0
    %840 = vmatpush.msra.mxu0 0.0
    %841 = vmatpush.msra.mxu0 0.0
    %842 = vmatpush.msra.mxu0 0.0
    %843 = vmatpush.msra.mxu0 %v91
    %844 = vmatpush.msra.mxu0 %v89
    %845 = vmatpush.msra.mxu0 %v87
    %846 = vmatpush.msra.mxu0 %v85
    %847 = vmatpush.msra.mxu0 %v83
    %848 = vmatpush.msra.mxu0 %v81
    %849 = vmatpush.msra.mxu0 %v79
    %850 = vmatpush.msra.mxu0 %v77
    %851 = vmatmul.f32.gmra.mxu0 %v813
    %v852 = vpop.f32.mrf.mxu0
    %v853 = vadd.f32 0.0, %v852
    %854 = vdwg.mxu0
    %v855 = vadd.f32 %v833, %v179
    %v856 = vxor.u32 %v855, 2147483648
    %v857 = vmul.f32 %v856, 1.442695
    %v858 = vpow.pop %v857
    %v859 = vadd.f32 %v858, 1.0
    %v860 = vrcp.pop %v859
    %v861 = vmul.f32 %v859, %v860
    %v862 = vsub.f32 1.0, %v861
    %v863 = vmul.f32 %v860, %v862
    %v864 = vadd.f32 %v860, %v863
    %vm865 = vweird.f32 %v859
    %vm866 = vweird.f32 %v860
    %vm867 = vmor %vm865, %vm866
    %v868 = vsel %vm867, %v860, %v864
    %v869 = vand.u32 2147483647, %v859
    %vm870 = vcmp.eq.f32.partialorder %v869, 8.507059e+37
    %v871 = vand.u32 %v859, 2147483648
    %v872 = vor.u32 1.1754944e-38, %v871
    %v873 = vsel %vm870, %v872, %v868
    %v874 = vmul.f32 1.0, %v873
    %v875 = vtanh.pop %v855
    %v876 = vmul.f32 %v874, %v750
    %878 = vrot.lane.b32.xlu0 %v875, 32
    %v879 = vpop.permute.xlu0 %878
    %v881 = vmul.f32 %v874, %v879
    %883 = vrot.lane.b32.xlu0 %v881, 32
    %v884 = vpop.permute.xlu0 %883
    %v886 = vadd.f32 %v876, %v884
    %v887 = vtanh.pop %v886
    %889 = vrot.lane.b32.xlu0 %v887, 32
    %v890 = vpop.permute.xlu0 %889
    %v892 = vmul.f32 %v874, %v890
    %v894 = vrot.slane %v853, 4
    %v896 = vadd.f32 %v68, %v894
    %v897 = vxor.u32 %v896, 2147483648
    %v898 = vmul.f32 %v897, 1.442695
    %v899 = vpow.pop %v898
    %v900 = vadd.f32 %v899, 1.0
    %v901 = vrcp.pop %v900
    %v902 = vmul.f32 %v900, %v901
    %v903 = vsub.f32 1.0, %v902
    %v904 = vmul.f32 %v901, %v903
    %v905 = vadd.f32 %v901, %v904
    %vm906 = vweird.f32 %v900
    %vm907 = vweird.f32 %v901
    %vm908 = vmor %vm906, %vm907
    %v909 = vsel %vm908, %v901, %v905
    %v910 = vand.u32 2147483647, %v900
    %vm911 = vcmp.eq.f32.partialorder %v910, 8.507059e+37
    %v912 = vand.u32 %v900, 2147483648
    %v913 = vor.u32 1.1754944e-38, %v912
    %v914 = vsel %vm911, %v913, %v909
    %v915 = vmul.f32 1.0, %v914
    %v916 = vtanh.pop %v896
    %v918 = vrot.slane %v794, 6
    %v920 = vmul.f32 %v915, %v918
    %922 = vrot.lane.b32.xlu0 %v916, 32
    %v923 = vpop.permute.xlu0 %922
    %v925 = vmul.f32 %v915, %v923
    %927 = vrot.lane.b32.xlu0 %v925, 32
    %v928 = vpop.permute.xlu0 %927
    %v930 = vadd.f32 %v920, %v928
    %v931 = vtanh.pop %v930
    %933 = vrot.lane.b32.xlu0 %v931, 32
    %v934 = vpop.permute.xlu0 %933
    %v936 = vmul.f32 %v915, %v934
    %938 = vrot.lane.b32.xlu0 %v936, 64
    %v939 = vpop.permute.xlu0 %938
    %v942 = vrot.slane %v892, 4
    %943 = vrot.lane.b32.xlu0 %v942, 96
    %v944 = vpop.permute.xlu0 %943
    %v946 = vsel %vm133, %v939, %v944
    %v948 = vrot.slane %v946, 4
    %v949 = vsel %vm135, %v948, 0
    %951 = vmatpush.msra.mxu0 0.0
    %952 = vmatpush.msra.mxu0 0.0
    %953 = vmatpush.msra.mxu0 0.0
    %954 = vmatpush.msra.mxu0 0.0
    %955 = vmatpush.msra.mxu0 0.0
    %956 = vmatpush.msra.mxu0 0.0
    %957 = vmatpush.msra.mxu0 0.0
    %958 = vmatpush.msra.mxu0 0.0
    %959 = vmatpush.msra.mxu0 %v90
    %960 = vmatpush.msra.mxu0 %v88
    %961 = vmatpush.msra.mxu0 %v86
    %962 = vmatpush.msra.mxu0 %v84
    %963 = vmatpush.msra.mxu0 %v82
    %964 = vmatpush.msra.mxu0 %v80
    %965 = vmatpush.msra.mxu0 %v78
    %966 = vmatpush.msra.mxu0 %v76
    %967 = vmatmul.f32.gmra.mxu0 %v949
    %v968 = vpop.f32.mrf.mxu0
    %v969 = vadd.f32 0.0, %v968
    %970 = vdwg.mxu0
    %971 = vmatpush.msra.mxu0 0.0
    %972 = vmatpush.msra.mxu0 0.0
    %973 = vmatpush.msra.mxu0 0.0
    %974 = vmatpush.msra.mxu0 0.0
    %975 = vmatpush.msra.mxu0 0.0
    %976 = vmatpush.msra.mxu0 0.0
    %977 = vmatpush.msra.mxu0 0.0
    %978 = vmatpush.msra.mxu0 0.0
    %979 = vmatpush.msra.mxu0 %v91
    %980 = vmatpush.msra.mxu0 %v89
    %981 = vmatpush.msra.mxu0 %v87
    %982 = vmatpush.msra.mxu0 %v85
    %983 = vmatpush.msra.mxu0 %v83
    %984 = vmatpush.msra.mxu0 %v81
    %985 = vmatpush.msra.mxu0 %v79
    %986 = vmatpush.msra.mxu0 %v77
    %987 = vmatmul.f32.gmra.mxu0 %v949
    %v988 = vpop.f32.mrf.mxu0
    %v989 = vadd.f32 0.0, %v988
    %990 = vdwg.mxu0
    %v991 = vadd.f32 %v969, %v179
    %v992 = vxor.u32 %v991, 2147483648
    %v993 = vmul.f32 %v992, 1.442695
    %v994 = vpow.pop %v993
    %v995 = vadd.f32 %v994, 1.0
    %v996 = vrcp.pop %v995
    %v997 = vmul.f32 %v995, %v996
    %v998 = vsub.f32 1.0, %v997
    %v999 = vmul.f32 %v996, %v998
    %v1000 = vadd.f32 %v996, %v999
    %vm1001 = vweird.f32 %v995
    %vm1002 = vweird.f32 %v996
    %vm1003 = vmor %vm1001, %vm1002
    %v1004 = vsel %vm1003, %v996, %v1000
    %v1005 = vand.u32 2147483647, %v995
    %vm1006 = vcmp.eq.f32.partialorder %v1005, 8.507059e+37
    %v1007 = vand.u32 %v995, 2147483648
    %v1008 = vor.u32 1.1754944e-38, %v1007
    %v1009 = vsel %vm1006, %v1008, %v1004
    %v1010 = vmul.f32 1.0, %v1009
    %v1011 = vtanh.pop %v991
    %v1012 = vmul.f32 %v1010, %v886
    %1014 = vrot.lane.b32.xlu0 %v1011, 32
    %v1015 = vpop.permute.xlu0 %1014
    %v1017 = vmul.f32 %v1010, %v1015
    %1019 = vrot.lane.b32.xlu0 %v1017, 32
    %v1020 = vpop.permute.xlu0 %1019
    %v1022 = vadd.f32 %v1012, %v1020
    %v1023 = vtanh.pop %v1022
    %1025 = vrot.lane.b32.xlu0 %v1023, 32
    %v1026 = vpop.permute.xlu0 %1025
    %v1028 = vmul.f32 %v1010, %v1026
    %v1030 = vrot.slane %v989, 2
    %v1032 = vadd.f32 %v68, %v1030
    %v1033 = vxor.u32 %v1032, 2147483648
    %v1034 = vmul.f32 %v1033, 1.442695
    %v1035 = vpow.pop %v1034
    %v1036 = vadd.f32 %v1035, 1.0
    %v1037 = vrcp.pop %v1036
    %v1038 = vmul.f32 %v1036, %v1037
    %v1039 = vsub.f32 1.0, %v1038
    %v1040 = vmul.f32 %v1037, %v1039
    %v1041 = vadd.f32 %v1037, %v1040
    %vm1042 = vweird.f32 %v1036
    %vm1043 = vweird.f32 %v1037
    %vm1044 = vmor %vm1042, %vm1043
    %v1045 = vsel %vm1044, %v1037, %v1041
    %v1046 = vand.u32 2147483647, %v1036
    %vm1047 = vcmp.eq.f32.partialorder %v1046, 8.507059e+37
    %v1048 = vand.u32 %v1036, 2147483648
    %v1049 = vor.u32 1.1754944e-38, %v1048
    %v1050 = vsel %vm1047, %v1049, %v1045
    %v1051 = vmul.f32 1.0, %v1050
    %v1052 = vtanh.pop %v1032
    %v1054 = vrot.slane %v930, 6
    %v1056 = vmul.f32 %v1051, %v1054
    %1058 = vrot.lane.b32.xlu0 %v1052, 32
    %v1059 = vpop.permute.xlu0 %1058
    %v1061 = vmul.f32 %v1051, %v1059
    %1063 = vrot.lane.b32.xlu0 %v1061, 32
    %v1064 = vpop.permute.xlu0 %1063
    %v1066 = vadd.f32 %v1056, %v1064
    %v1067 = vtanh.pop %v1066
    %1069 = vrot.lane.b32.xlu0 %v1067, 32
    %v1070 = vpop.permute.xlu0 %1069
    %v1072 = vmul.f32 %v1051, %v1070
    %1074 = vrot.lane.b32.xlu0 %v1072, 64
    %v1075 = vpop.permute.xlu0 %1074
    %v1078 = vrot.slane %v1028, 2
    %1079 = vrot.lane.b32.xlu0 %v1078, 96
    %v1080 = vpop.permute.xlu0 %1079
    %v1082 = vsel %vm133, %v1075, %v1080
    %v1084 = vrot.slane %v1082, 6
    %v1085 = vsel %vm135, %v1084, 0
    %1087 = vmatpush.msra.mxu0 0.0
    %1088 = vmatpush.msra.mxu0 0.0
    %1089 = vmatpush.msra.mxu0 0.0
    %1090 = vmatpush.msra.mxu0 0.0
    %1091 = vmatpush.msra.mxu0 0.0
    %1092 = vmatpush.msra.mxu0 0.0
    %1093 = vmatpush.msra.mxu0 0.0
    %1094 = vmatpush.msra.mxu0 0.0
    %1095 = vmatpush.msra.mxu0 %v90
    %1096 = vmatpush.msra.mxu0 %v88
    %1097 = vmatpush.msra.mxu0 %v86
    %1098 = vmatpush.msra.mxu0 %v84
    %1099 = vmatpush.msra.mxu0 %v82
    %1100 = vmatpush.msra.mxu0 %v80
    %1101 = vmatpush.msra.mxu0 %v78
    %1102 = vmatpush.msra.mxu0 %v76
    %1103 = vmatmul.f32.gmra.mxu0 %v1085
    %v1104 = vpop.f32.mrf.mxu0
    %v1105 = vadd.f32 0.0, %v1104
    %1106 = vdwg.mxu0
    %v1107 = vadd.f32 %v1105, %v179
    %v1108 = vxor.u32 %v1107, 2147483648
    %v1109 = vmul.f32 %v1108, 1.442695
    %v1110 = vpow.pop %v1109
    %v1111 = vadd.f32 %v1110, 1.0
    %v1112 = vrcp.pop %v1111
    %v1113 = vmul.f32 %v1111, %v1112
    %v1114 = vsub.f32 1.0, %v1113
    %v1115 = vmul.f32 %v1112, %v1114
    %v1116 = vadd.f32 %v1112, %v1115
    %vm1117 = vweird.f32 %v1111
    %vm1118 = vweird.f32 %v1112
    %vm1119 = vmor %vm1117, %vm1118
    %v1120 = vsel %vm1119, %v1112, %v1116
    %v1121 = vand.u32 2147483647, %v1111
    %vm1122 = vcmp.eq.f32.partialorder %v1121, 8.507059e+37
    %v1123 = vand.u32 %v1111, 2147483648
    %v1124 = vor.u32 1.1754944e-38, %v1123
    %v1125 = vsel %vm1122, %v1124, %v1120
    %v1126 = vmul.f32 1.0, %v1125
    %v1127 = vtanh.pop %v1107
    %v1128 = vmul.f32 %v1126, %v1022
    %1130 = vrot.lane.b32.xlu0 %v1127, 32
    %v1131 = vpop.permute.xlu0 %1130
    %v1133 = vmul.f32 %v1126, %v1131
    %1135 = vrot.lane.b32.xlu0 %v1133, 32
    %v1136 = vpop.permute.xlu0 %1135
    %v1138 = vadd.f32 %v1128, %v1136
    %v1139 = vtanh.pop %v1138
    %1141 = vrot.lane.b32.xlu0 %v1139, 32
    %v1142 = vpop.permute.xlu0 %1141
    %v1144 = vmul.f32 %v1126, %v1142
    %v1145 = vperm.slane %v75, 0
    %1147 = vrot.lane.b32.xlu0 %v1144, 64
    %v1148 = vpop.permute.xlu0 %1147
    %v1149 = vsel %vm133, %v1148, 0
    %1151 = vmatpush.msra.mxu0 0.0
    %1152 = vmatpush.msra.mxu0 0.0
    %1153 = vmatpush.msra.mxu0 0.0
    %1154 = vmatpush.msra.mxu0 0.0
    %1155 = vmatpush.msra.mxu0 0.0
    %1156 = vmatpush.msra.mxu0 0.0
    %1157 = vmatpush.msra.mxu0 0.0
    %1158 = vmatpush.msra.mxu0 0.0
    %1159 = vmatpush.msra.mxu0 0.0
    %1160 = vmatpush.msra.mxu0 0.0
    %1161 = vmatpush.msra.mxu0 0.0
    %1162 = vmatpush.msra.mxu0 0.0
    %1163 = vmatpush.msra.mxu0 %v74
    %1164 = vmatpush.msra.mxu0 %v73
    %1165 = vmatpush.msra.mxu0 %v72
    %1166 = vmatpush.msra.mxu0 %v71
    %1167 = vmatmul.f32.gmra.mxu0 %v1149
    %v1168 = vpop.f32.mrf.mxu0
    %v1169 = vadd.f32 %v1145, %v1168
    %1170 = vdwg.mxu0
    %1171 = vst [vmem:[#allocation2] sm:$0x3] %v1169
    // Predicated region
    $region14: #{leonard_lstm.1} parent=1 // pred_check
      _
    $region15: #{leonard_lstm.1} parent=1 // pred_check_branch
      %1173 = sbr.rel (0) target = $region17
    $region16: #{leonard_lstm.1} parent=1 // pred_region
      %1175 = vsyncadd [#allocation3], 0
      %s1177 = sshll.u32 [#allocation2], 4
      %s1178 = int_to_ptr.vmem [resolvable:$true] %s1177
      %s1179 = sshll.u32 %s3, 4
      %s1180 = int_to_ptr.hbm [resolvable:$true] %s1179
      %1182 = dma.vmem_to_hbm [thread:$0]  %s1178, 32, %s1180, [#allocation3]
    $region17: #{leonard_lstm.1} parent=1 // pred_fallthru
      _
    // Predicated region
    $region18: #{leonard_lstm.1} parent=1 // pred_check
      _
    $region19: #{leonard_lstm.1} parent=1 // pred_check_branch
      %1184 = sbr.rel (0) target = $region21
    $region20: #{leonard_lstm.1} parent=1 // pred_region
      %1186 = dma.done [#allocation3], 32
    $region21: #{leonard_lstm.1} parent=1 // pred_fallthru
      _
    %1187 = vsyncpa [#allocation3], 1

</llo_original>
